<compile_context>
chip_gen: v7x
topology: tpu7x:2x2x1
jax: 0.10.0
libtpu: 0.0.40
codegen_flags: <defaults>
</compile_context>

<pallas_src>
import functools
import math

import jax
import jax.numpy as jnp
from jax.experimental import pallas as pl
from jax.experimental.pallas import tpu as pltpu

PRIOR_SIGMA = 1.0  # prior_var in the module is used as a std: Normal(0, prior_var)


def _round_up(x, m):
    return (x + m - 1) // m * m


def _pick_tile(padded, candidates=(512, 256, 128)):
    # padded is a multiple of 128, so this always returns >= 128.
    for c in candidates:
        if padded % c == 0:
            return c
    return padded


def _stable_softplus(z):
    # log1p(exp(z)) without overflow for large z.
    return jnp.maximum(z, 0.0) + jnp.log1p(jnp.exp(-jnp.abs(z)))


def _softplus10_nonneg(s):
    # softplus(s, beta=10) = log1p(exp(10 s))/10; stable form for s >= 0.
    return s + jnp.log1p(jnp.exp(-10.0 * s)) / 10.0


def _bayesian_linear_kernel(in_f, prior_sigma,
                            x_ref, wmu_ref, wrho_ref, bmu_ref, brho_ref,
                            eps_w_ref, eps_b_ref,
                            out_ref, klcol_ref, acc_ref):
    # grid = (out_feature tiles [parallel], in_feature tiles [arbitrary/reduction])
    k = pl.program_id(1)
    nk = pl.num_programs(1)

    log_ps = jnp.float32(math.log(prior_sigma))
    inv2pv = jnp.float32(1.0 / (2.0 * prior_sigma * prior_sigma))

    @pl.when(k == 0)
    def _():
        acc_ref[...] = jnp.zeros_like(acc_ref)
        klcol_ref[...] = jnp.zeros_like(klcol_ref)

    # ---- sample this (TK, TN) weight tile --------------------------------
    wmu = wmu_ref[...]
    wsig = _stable_softplus(wrho_ref[...])                 # sigma = softplus(rho)
    w = wmu + _softplus10_nonneg(wsig) * eps_w_ref[...]

    # ---- matmul partial: x (B, TK) @ w (TK, TN) on the MXU ---------------
    acc_ref[...] += jnp.dot(x_ref[...], w, preferred_element_type=jnp.float32)

    # ---- weight KL, reduced over the K (sublane) axis only ---------------
    # Padded columns are discarded by the wrapper slice; only padded K rows
    # need masking here.
    tk = wmu.shape[0]
    row = jax.lax.broadcasted_iota(jnp.int32, wmu.shape, 0) + k * tk
    kl_w = jnp.where(
        row < in_f,
        log_ps - jnp.log(wsig) + (wsig * wsig + wmu * wmu) * inv2pv - 0.5,
        0.0)
    klcol_ref[...] += jnp.sum(kl_w, axis=0, keepdims=True)

    # ---- last K step: sample bias, emit output tile and bias KL ----------
    @pl.when(k == nk - 1)
    def _():
        bmu = bmu_ref[...]
        bsig = _stable_softplus(brho_ref[...])
        b = bmu + _softplus10_nonneg(bsig) * eps_b_ref[...]
        out_ref[...] = acc_ref[...] + b                    # (1, TN) broadcasts over batch
        klcol_ref[...] += (log_ps - jnp.log(bsig)
                           + (bsig * bsig + bmu * bmu) * inv2pv - 0.5)


def bayesian_linear(x, weight_mu, weight_rho, bias_mu, bias_rho, eps_w, eps_b,
                    *, prior_sigma=PRIOR_SIGMA):
    """Pallas-backed BayesianLinear.forward. Returns (output, kl_scalar)."""
    x = x.astype(jnp.float32)
    batch, in_f = x.shape
    out_f, _ = weight_mu.shape

    kp = _round_up(in_f, 128)          # padded reduction dim (lane-aligned)
    np_ = _round_up(out_f, 128)        # padded output dim (lane-dense stores)
    tk = _pick_tile(kp)
    tn = _pick_tile(np_)
    grid = (np_ // tn, kp // tk)       # (out tiles "parallel", in tiles "arbitrary")

    # (K, N) orientation: standard MXU contraction, no in-kernel transpose,
    # out_features on the lane dimension. Done once in XLA.
    def pad_kn(a):                     # (out_f, in_f) -> (kp, np_)
        return jnp.pad(a.T.astype(jnp.float32),
                       ((0, kp - in_f), (0, np_ - out_f)))

    def pad_n(a):                      # (out_f,) -> (1, np_)
        return jnp.pad(a.astype(jnp.float32).reshape(1, out_f),
                       ((0, 0), (0, np_ - out_f)))

    xp = jnp.pad(x, ((0, 0), (0, kp - in_f)))
    wmu_t, wrho_t, eps_w_t = pad_kn(weight_mu), pad_kn(weight_rho), pad_kn(eps_w)
    bmu2, brho2, eps_b2 = pad_n(bias_mu), pad_n(bias_rho), pad_n(eps_b)

    kernel = functools.partial(_bayesian_linear_kernel, in_f, prior_sigma)

    out_p, kl_cols = pl.pallas_call(
        kernel,
        out_shape=(jax.ShapeDtypeStruct((batch, np_), jnp.float32),
                   jax.ShapeDtypeStruct((1, np_), jnp.float32)),
        grid_spec=pltpu.PrefetchScalarGridSpec(
            num_scalar_prefetch=0,
            grid=grid,
            in_specs=[
                pl.BlockSpec((batch, tk), lambda i, k: (0, k)),   # x
                pl.BlockSpec((tk, tn), lambda i, k: (k, i)),      # weight_mu.T
                pl.BlockSpec((tk, tn), lambda i, k: (k, i)),      # weight_rho.T
                pl.BlockSpec((1, tn), lambda i, k: (0, i)),       # bias_mu
                pl.BlockSpec((1, tn), lambda i, k: (0, i)),       # bias_rho
                pl.BlockSpec((tk, tn), lambda i, k: (k, i)),      # eps_w.T
                pl.BlockSpec((1, tn), lambda i, k: (0, i)),       # eps_b
            ],
            out_specs=(
                pl.BlockSpec((batch, tn), lambda i, k: (0, i)),   # output tile
                pl.BlockSpec((1, tn), lambda i, k: (0, i)),       # per-column KL
            ),
            scratch_shapes=[pltpu.VMEM((batch, tn), jnp.float32)],
        ),
        compiler_params=pltpu.CompilerParams(
            dimension_semantics=("parallel", "arbitrary"),
            vmem_limit_bytes=32 * 1024 * 1024,   # >= scoped default on v5e/v6e/v7x
        ),
    )(xp, wmu_t, wrho_t, bmu2, brho2, eps_w_t, eps_b2)

    kl = jnp.sum(kl_cols[0, :out_f])   # tiny final reduction over valid columns
    return out_p[:, :out_f], kl


def _reference(x, weight_mu, weight_rho, bias_mu, bias_rho, eps_w, eps_b,
               prior_sigma=PRIOR_SIGMA):
    wsig = jnp.log1p(jnp.exp(weight_rho))
    bsig = jnp.log1p(jnp.exp(bias_rho))
    w = weight_mu + jnp.log1p(jnp.exp(10.0 * wsig)) / 10.0 * eps_w
    b = bias_mu + jnp.log1p(jnp.exp(10.0 * bsig)) / 10.0 * eps_b
    y = x @ w.T + b

    def kl(mu, sig):
        return jnp.sum(math.log(prior_sigma) - jnp.log(sig)
                       + (sig ** 2 + mu ** 2) / (2.0 * prior_sigma ** 2) - 0.5)

    return y, kl(weight_mu, wsig) + kl(bias_mu, bsig)


if __name__ == "__main__":
    # Small but non-aligned sizes: exercises padding (300->384, 280->384),
    # a 3x3 grid (K-reduction accumulation + multiple parallel N tiles).
    in_features, out_features, batch = 300, 280, 8

    key = jax.random.PRNGKey(0)
    k_w, k_b, k_x, k_ew, k_eb = jax.random.split(key, 5)

    # Deterministic init mirroring reset_parameters():
    # kaiming_uniform_(a=sqrt(5)) on (out, in) -> U(-1/sqrt(fan_in), 1/sqrt(fan_in))
    fan_in = in_features
    bound = 1.0 / math.sqrt(fan_in)
    weight_mu = jax.random.uniform(k_w, (out_features, in_features),
                                   jnp.float32, -bound, bound)
    bias_mu = jax.random.uniform(k_b, (out_features,), jnp.float32, -bound, bound)
    weight_rho = jnp.full((out_features, in_features), -5.0, jnp.float32)
    bias_rho = jnp.full((out_features,), -5.0, jnp.float32)

    x = jax.random.normal(k_x, (batch, in_features), jnp.float32)
    # randn_like noise generated outside the kernel (glue), consumed inside.
    # TODO(synk): optionally generate eps on-chip (pltpu.prng_seed/prng_random_bits)
    # to drop one weight-sized HBM read; kept external to bit-match randn semantics.
    eps_w = jax.random.normal(k_ew, (out_features, in_features), jnp.float32)
    eps_b = jax.random.normal(k_eb, (out_features,), jnp.float32)

    out, kl = jax.jit(bayesian_linear)(x, weight_mu, weight_rho, bias_mu,
                                       bias_rho, eps_w, eps_b)
    jax.block_until_ready((out, kl))

    out_exp, kl_exp = _reference(x, weight_mu, weight_rho, bias_mu, bias_rho,
                                 eps_w, eps_b)
    assert out.shape == (batch, out_features)
    assert jnp.allclose(out, out_exp, atol=1e-3, rtol=1e-3), \
        float(jnp.max(jnp.abs(out - out_exp)))
    assert jnp.allclose(kl, kl_exp, atol=1e-2, rtol=1e-4), (float(kl), float(kl_exp))

    print("KERNEL_OK")
</pallas_src>

<mosaic_0001>
module attributes {stable_mosaic.version = 11 : i64} {
  func.func @_bayesian_linear_kernel(%arg0: i32, %arg1: i32, %arg2: memref<8x128xf32, #tpu.memory_space<vmem>>, %arg3: memref<128x128xf32, #tpu.memory_space<vmem>>, %arg4: memref<128x128xf32, #tpu.memory_space<vmem>>, %arg5: memref<1x128xf32, #tpu.memory_space<vmem>>, %arg6: memref<1x128xf32, #tpu.memory_space<vmem>>, %arg7: memref<128x128xf32, #tpu.memory_space<vmem>>, %arg8: memref<1x128xf32, #tpu.memory_space<vmem>>, %arg9: memref<8x128xf32, #tpu.memory_space<vmem>>, %arg10: memref<1x128xf32, #tpu.memory_space<vmem>>, %arg11: memref<8x128xf32, #tpu.memory_space<vmem>>) attributes {dimension_semantics = [#tpu.dimension_semantics<parallel>, #tpu.dimension_semantics<arbitrary>], iteration_bounds = array<i64: 3, 3>, scalar_prefetch = 0 : i64, scratch_operands = 1 : i64, tpu.core_type = #tpu.core_type<tc>, window_params = [{transform_indices = @transform_0, window_bounds = array<i64: 8, 128>}, {transform_indices = @transform_1, window_bounds = array<i64: 128, 128>}, {transform_indices = @transform_2, window_bounds = array<i64: 128, 128>}, {transform_indices = @transform_3, window_bounds = array<i64: 1, 128>}, {transform_indices = @transform_4, window_bounds = array<i64: 1, 128>}, {transform_indices = @transform_5, window_bounds = array<i64: 128, 128>}, {transform_indices = @transform_6, window_bounds = array<i64: 1, 128>}, {transform_indices = @transform_7, window_bounds = array<i64: 8, 128>}, {transform_indices = @transform_8, window_bounds = array<i64: 1, 128>}]} {
    %c0_i32 = arith.constant 0 : i32
    %0 = arith.cmpi eq, %arg1, %c0_i32 : i32
    %1 = arith.extui %0 : i1 to i32
    %c0_i32_0 = arith.constant 0 : i32
    %2 = arith.cmpi ne, %1, %c0_i32_0 : i32
    scf.if %2 {
      %cst_28 = arith.constant 0.000000e+00 : f32
      %55 = vector.broadcast %cst_28 : f32 to vector<8x128xf32>
      %c0_29 = arith.constant 0 : index
      %c0_30 = arith.constant 0 : index
      %56 = vector.load %arg11[%c0_29, %c0_30] : memref<8x128xf32, #tpu.memory_space<vmem>>, vector<8x128xf32>
      tpu.vector_store %arg11[%c0_29, %c0_30], %55 {strides = array<i32>} : memref<8x128xf32, #tpu.memory_space<vmem>>, vector<8x128xf32>,
      %cst_31 = arith.constant 0.000000e+00 : f32
      %57 = vector.broadcast %cst_31 : f32 to vector<1x128xf32>
      %c0_32 = arith.constant 0 : index
      %c0_33 = arith.constant 0 : index
      %58 = vector.load %arg10[%c0_32, %c0_33] : memref<1x128xf32, #tpu.memory_space<vmem>>, vector<1x128xf32>
      tpu.vector_store %arg10[%c0_32, %c0_33], %57 {strides = array<i32>} : memref<1x128xf32, #tpu.memory_space<vmem>>, vector<1x128xf32>,
    } else {
    }
    %c0 = arith.constant 0 : index
    %c0_1 = arith.constant 0 : index
    %3 = vector.load %arg3[%c0, %c0_1] : memref<128x128xf32, #tpu.memory_space<vmem>>, vector<128x128xf32>
    %c0_2 = arith.constant 0 : index
    %c0_3 = arith.constant 0 : index
    %4 = vector.load %arg4[%c0_2, %c0_3] : memref<128x128xf32, #tpu.memory_space<vmem>>, vector<128x128xf32>
    %cst = arith.constant 0.000000e+00 : f32
    %5 = vector.broadcast %cst : f32 to vector<128x128xf32>
    %6 = arith.maximumf %4, %5 : vector<128x128xf32>
    %7 = math.absf %4 : vector<128x128xf32>
    %cst_4 = arith.constant 0.000000e+00 : f32
    %8 = vector.broadcast %cst_4 : f32 to vector<128x128xf32>
    %9 = arith.subf %8, %7 : vector<128x128xf32>
    %10 = math.exp %9 : vector<128x128xf32>
    %11 = math.log1p %10 : vector<128x128xf32>
    %12 = arith.addf %6, %11 : vector<128x128xf32>
    %cst_5 = arith.constant -1.000000e+01 : f32
    %13 = vector.broadcast %cst_5 : f32 to vector<128x128xf32>
    %14 = arith.mulf %13, %12 : vector<128x128xf32>
    %15 = math.exp %14 : vector<128x128xf32>
    %16 = math.log1p %15 : vector<128x128xf32>
    %cst_6 = arith.constant 1.000000e+01 : f32
    %17 = vector.broadcast %cst_6 : f32 to vector<128x128xf32>
    %18 = arith.divf %16, %17 : vector<128x128xf32>
    %19 = arith.addf %12, %18 : vector<128x128xf32>
    %c0_7 = arith.constant 0 : index
    %c0_8 = arith.constant 0 : index
    %20 = vector.load %arg7[%c0_7, %c0_8] : memref<128x128xf32, #tpu.memory_space<vmem>>, vector<128x128xf32>
    %21 = arith.mulf %19, %20 : vector<128x128xf32>
    %22 = arith.addf %3, %21 : vector<128x128xf32>
    %c0_9 = arith.constant 0 : index
    %c0_10 = arith.constant 0 : index
    %23 = vector.load %arg11[%c0_9, %c0_10] : memref<8x128xf32, #tpu.memory_space<vmem>>, vector<8x128xf32>
    %c0_11 = arith.constant 0 : index
    %c0_12 = arith.constant 0 : index
    %24 = vector.load %arg2[%c0_11, %c0_12] : memref<8x128xf32, #tpu.memory_space<vmem>>, vector<8x128xf32>
    %cst_13 = arith.constant dense<0.000000e+00> : vector<8x128xf32>
    %25 = tpu.matmul %24, %22, %cst_13 {dimension_numbers = #tpu.dot_dimension_numbers<[1], [0], [0], [1], [0, 0, 1, 1], [], []>} : vector<8x128xf32>, vector<128x128xf32>, vector<8x128xf32> -> vector<8x128xf32>
    %26 = arith.addf %23, %25 : vector<8x128xf32>
    %c0_14 = arith.constant 0 : index
    %c0_15 = arith.constant 0 : index
    %27 = vector.load %arg11[%c0_14, %c0_15] : memref<8x128xf32, #tpu.memory_space<vmem>>, vector<8x128xf32>
    tpu.vector_store %arg11[%c0_14, %c0_15], %26 {strides = array<i32>} : memref<8x128xf32, #tpu.memory_space<vmem>>, vector<8x128xf32>,
    %28 = tpu.iota {dimensions = array<i32: 0>} : vector<128x128xi32>
    %c128_i32 = arith.constant 128 : i32
    %29 = arith.muli %arg1, %c128_i32 : i32
    %30 = vector.broadcast %29 : i32 to vector<128x128xi32>
    %31 = arith.addi %28, %30 : vector<128x128xi32>
    %c300_i32 = arith.constant 300 : i32
    %32 = vector.broadcast %c300_i32 : i32 to vector<128x128xi32>
    %33 = arith.cmpi slt, %31, %32 : vector<128x128xi32>
    %34 = math.log %12 : vector<128x128xf32>
    %cst_16 = arith.constant 0.000000e+00 : f32
    %35 = vector.broadcast %cst_16 : f32 to vector<128x128xf32>
    %36 = arith.subf %35, %34 : vector<128x128xf32>
    %37 = arith.mulf %12, %12 : vector<128x128xf32>
    %38 = arith.mulf %3, %3 : vector<128x128xf32>
    %39 = arith.addf %37, %38 : vector<128x128xf32>
    %cst_17 = arith.constant 5.000000e-01 : f32
    %40 = vector.broadcast %cst_17 : f32 to vector<128x128xf32>
    %41 = arith.mulf %39, %40 : vector<128x128xf32>
    %42 = arith.addf %36, %41 : vector<128x128xf32>
    %cst_18 = arith.constant 5.000000e-01 : f32
    %43 = vector.broadcast %cst_18 : f32 to vector<128x128xf32>
    %44 = arith.subf %42, %43 : vector<128x128xf32>
    %cst_19 = arith.constant 0.000000e+00 : f32
    %45 = vector.broadcast %cst_19 : f32 to vector<128x128xf32>
    %46 = arith.select %33, %44, %45 : vector<128x128xi1>, vector<128x128xf32>
    %c0_20 = arith.constant 0 : index
    %c0_21 = arith.constant 0 : index
    %47 = vector.load %arg10[%c0_20, %c0_21] : memref<1x128xf32, #tpu.memory_space<vmem>>, vector<1x128xf32>
    %cst_22 = arith.constant dense<0.000000e+00> : vector<128xf32>
    %48 = vector.multi_reduction <add>, %46, %cst_22 [0] : vector<128x128xf32> to vector<128xf32>
    %49 = vector.shape_cast %48 : vector<128xf32> to vector<1x128xf32>
    %50 = arith.addf %47, %49 : vector<1x128xf32>
    %c0_23 = arith.constant 0 : index
    %c0_24 = arith.constant 0 : index
    %51 = vector.load %arg10[%c0_23, %c0_24] : memref<1x128xf32, #tpu.memory_space<vmem>>, vector<1x128xf32>
    tpu.vector_store %arg10[%c0_23, %c0_24], %50 {strides = array<i32>} : memref<1x128xf32, #tpu.memory_space<vmem>>, vector<1x128xf32>,
    %c2_i32 = arith.constant 2 : i32
    %52 = arith.cmpi eq, %arg1, %c2_i32 : i32
    %53 = arith.extui %52 : i1 to i32
    %cst_25 = arith.constant 0.000000e+00 : f32
    %cst_26 = arith.constant 5.000000e-01 : f32
    %c0_i32_27 = arith.constant 0 : i32
    %54 = arith.cmpi ne, %53, %c0_i32_27 : i32
    scf.if %54 {
      %c0_28 = arith.constant 0 : index
      %c0_29 = arith.constant 0 : index
      %55 = vector.load %arg5[%c0_28, %c0_29] : memref<1x128xf32, #tpu.memory_space<vmem>>, vector<1x128xf32>
      %c0_30 = arith.constant 0 : index
      %c0_31 = arith.constant 0 : index
      %56 = vector.load %arg6[%c0_30, %c0_31] : memref<1x128xf32, #tpu.memory_space<vmem>>, vector<1x128xf32>
      %cst_32 = arith.constant 0.000000e+00 : f32
      %57 = vector.broadcast %cst_32 : f32 to vector<1x128xf32>
      %58 = arith.maximumf %56, %57 : vector<1x128xf32>
      %59 = math.absf %56 : vector<1x128xf32>
      %cst_33 = arith.constant 0.000000e+00 : f32
      %60 = vector.broadcast %cst_33 : f32 to vector<1x128xf32>
      %61 = arith.subf %60, %59 : vector<1x128xf32>
      %62 = math.exp %61 : vector<1x128xf32>
      %63 = math.log1p %62 : vector<1x128xf32>
      %64 = arith.addf %58, %63 : vector<1x128xf32>
      %cst_34 = arith.constant -1.000000e+01 : f32
      %65 = vector.broadcast %cst_34 : f32 to vector<1x128xf32>
      %66 = arith.mulf %65, %64 : vector<1x128xf32>
      %67 = math.exp %66 : vector<1x128xf32>
      %68 = math.log1p %67 : vector<1x128xf32>
      %cst_35 = arith.constant 1.000000e+01 : f32
      %69 = vector.broadcast %cst_35 : f32 to vector<1x128xf32>
      %70 = arith.divf %68, %69 : vector<1x128xf32>
      %71 = arith.addf %64, %70 : vector<1x128xf32>
      %c0_36 = arith.constant 0 : index
      %c0_37 = arith.constant 0 : index
      %72 = vector.load %arg8[%c0_36, %c0_37] : memref<1x128xf32, #tpu.memory_space<vmem>>, vector<1x128xf32>
      %73 = arith.mulf %71, %72 : vector<1x128xf32>
      %74 = arith.addf %55, %73 : vector<1x128xf32>
      %c0_38 = arith.constant 0 : index
      %c0_39 = arith.constant 0 : index
      %75 = vector.load %arg11[%c0_38, %c0_39] : memref<8x128xf32, #tpu.memory_space<vmem>>, vector<8x128xf32>
      %76 = vector.broadcast %74 : vector<1x128xf32> to vector<8x128xf32>
      %77 = arith.addf %75, %76 : vector<8x128xf32>
      %c0_40 = arith.constant 0 : index
      %c0_41 = arith.constant 0 : index
      %78 = vector.load %arg9[%c0_40, %c0_41] : memref<8x128xf32, #tpu.memory_space<vmem>>, vector<8x128xf32>
      tpu.vector_store %arg9[%c0_40, %c0_41], %77 {strides = array<i32>} : memref<8x128xf32, #tpu.memory_space<vmem>>, vector<8x128xf32>,
      %c0_42 = arith.constant 0 : index
      %c0_43 = arith.constant 0 : index
      %79 = vector.load %arg10[%c0_42, %c0_43] : memref<1x128xf32, #tpu.memory_space<vmem>>, vector<1x128xf32>
      %80 = math.log %64 : vector<1x128xf32>
      %81 = vector.broadcast %cst_25 : f32 to vector<1x128xf32>
      %82 = arith.subf %81, %80 : vector<1x128xf32>
      %83 = arith.mulf %64, %64 : vector<1x128xf32>
      %84 = arith.mulf %55, %55 : vector<1x128xf32>
      %85 = arith.addf %83, %84 : vector<1x128xf32>
      %86 = vector.broadcast %cst_26 : f32 to vector<1x128xf32>
      %87 = arith.mulf %85, %86 : vector<1x128xf32>
      %88 = arith.addf %82, %87 : vector<1x128xf32>
      %cst_44 = arith.constant 5.000000e-01 : f32
      %89 = vector.broadcast %cst_44 : f32 to vector<1x128xf32>
      %90 = arith.subf %88, %89 : vector<1x128xf32>
      %91 = arith.addf %79, %90 : vector<1x128xf32>
      %c0_45 = arith.constant 0 : index
      %c0_46 = arith.constant 0 : index
      %92 = vector.load %arg10[%c0_45, %c0_46] : memref<1x128xf32, #tpu.memory_space<vmem>>, vector<1x128xf32>
      tpu.vector_store %arg10[%c0_45, %c0_46], %91 {strides = array<i32>} : memref<1x128xf32, #tpu.memory_space<vmem>>, vector<1x128xf32>,
    } else {
    }
    return
  }
  func.func @transform_0(%arg0: i32, %arg1: i32) -> (i32, i32) {
    %c0_i32 = arith.constant 0 : i32
    %c0_i32_0 = arith.constant 0 : i32
    return %c0_i32, %arg1 : i32, i32
  }
  func.func @transform_1(%arg0: i32, %arg1: i32) -> (i32, i32) {
    %c0_i32 = arith.constant 0 : i32
    return %arg1, %arg0 : i32, i32
  }
  func.func @transform_2(%arg0: i32, %arg1: i32) -> (i32, i32) {
    %c0_i32 = arith.constant 0 : i32
    return %arg1, %arg0 : i32, i32
  }
  func.func @transform_3(%arg0: i32, %arg1: i32) -> (i32, i32) {
    %c0_i32 = arith.constant 0 : i32
    %c0_i32_0 = arith.constant 0 : i32
    return %c0_i32, %arg0 : i32, i32
  }
  func.func @transform_4(%arg0: i32, %arg1: i32) -> (i32, i32) {
    %c0_i32 = arith.constant 0 : i32
    %c0_i32_0 = arith.constant 0 : i32
    return %c0_i32, %arg0 : i32, i32
  }
  func.func @transform_5(%arg0: i32, %arg1: i32) -> (i32, i32) {
    %c0_i32 = arith.constant 0 : i32
    return %arg1, %arg0 : i32, i32
  }
  func.func @transform_6(%arg0: i32, %arg1: i32) -> (i32, i32) {
    %c0_i32 = arith.constant 0 : i32
    %c0_i32_0 = arith.constant 0 : i32
    return %c0_i32, %arg0 : i32, i32
  }
  func.func @transform_7(%arg0: i32, %arg1: i32) -> (i32, i32) {
    %c0_i32 = arith.constant 0 : i32
    %c0_i32_0 = arith.constant 0 : i32
    return %c0_i32, %arg0 : i32, i32
  }
  func.func @transform_8(%arg0: i32, %arg1: i32) -> (i32, i32) {
    %c0_i32 = arith.constant 0 : i32
    %c0_i32_0 = arith.constant 0 : i32
    return %c0_i32, %arg0 : i32, i32
  }
}

</mosaic_0001>

<llo_original>
// kernel: bayesian_linear.1
$region0: #{bayesian_linear.1}
  #allocation0 [shape = 'u32[]', space=smem, size = 0x4, offset = 0x4, fixed_abs, tag = 'smem constant byte address 0x4 - core index']
  #allocation1 [shape = 'u32[144,128]{1,0:T(1,128)}', space=vmem, size = 0x12000, scoped, tag = 'internal scratch']
  #allocation2 [shape = 'f32[8,128]{1,0:T(8,128)}', space=vmem, size = 0x1000, scoped, tag = 'scratch operand']
  %s0 = inlined_call_operand.vmem [shape: f32[8,384], index: 0, kind: input, shape index: {}]
  %s1 = inlined_call_operand.vmem [shape: f32[384,384], index: 1, kind: input, shape index: {}]
  %s2 = inlined_call_operand.vmem [shape: f32[384,384], index: 2, kind: input, shape index: {}]
  %s3 = inlined_call_operand.vmem [shape: f32[1,384], index: 3, kind: input, shape index: {}]
  %s4 = inlined_call_operand.vmem [shape: f32[1,384], index: 4, kind: input, shape index: {}]
  %s5 = inlined_call_operand.vmem [shape: f32[384,384], index: 5, kind: input, shape index: {}]
  %s6 = inlined_call_operand.vmem [shape: f32[1,384], index: 6, kind: input, shape index: {}]
  %s7 = inlined_call_operand.hbm [shape: f32[8,384], index: 7, kind: output, shape index: {0}]
  %s8 = inlined_call_operand.vmem [shape: f32[1,384], index: 8, kind: output, shape index: {1}]
  %9 = xla_tuple %s7, %s8
  %s10 = sld [smem:[#allocation0]]
  $region191: #{bayesian_linear.1} parent=0
    _
  %s12 = ssub.s32 1, %s10
  %s13 = scalar_select 0, %s12, %s10
  $region1: #{bayesian_linear.1} parent=0
    #allocation3 [shape = 'u8[131072]{0}', space=vmem, size = 0x20000, scoped, tag = 'input window, operand 1']
    #allocation4 [shape = 'u8[131072]{0}', space=vmem, size = 0x20000, scoped, tag = 'input window, operand 2']
    #allocation5 [shape = 'u8[131072]{0}', space=vmem, size = 0x20000, scoped, tag = 'input window, operand 5']
    #allocation6 [shape = 'u8[8192]{0}', space=vmem, size = 0x2000, scoped, tag = 'output window, operand 0']
    #allocation7 [shape = 's32[2]{0}', space=sflag, size = 0x8, scoped, tag = 'scoped memory for bayesian_linear.1']
    %14 = vsyncpa [#allocation7], 0
    %s15 = scalar_lea.sflag [#allocation7], 1
    %16 = vsyncpa %s15, 0
    loop: start=0, step=1, limit=11
    $region2: #{bayesian_linear.1} parent=1 // loop_pre_header
      _
    $region3: #{bayesian_linear.1} parent=1 // loop_header
      %s18 = sphi 0, %s22
      %p19 = scmp.ge.s32.totalorder %s18, 11
      %s25 = sphi 0, %s37
      %s26 = sphi 0, %s33
      %s27 = sphi 0, %s25
      %s28 = sphi 0, %s26
      %s29 = sphi 0, %s27
      %s30 = sphi 0, %s28
      %s40 = sphi 0, %s42
      %s43 = sphi 0, %s40
      %s44 = sphi 0, %s43
      %s60 = sphi 0, %s44
      %s68 = sphi 0, %s70
      %s71 = sphi 0, %s68
      %s72 = sphi 0, %s71
      %s88 = sphi 0, %s72
      %s96 = sphi 0, %s98
      %s99 = sphi 0, %s96
      %s100 = sphi 0, %s99
      %s116 = sphi 0, %s100
      %s122 = sphi 0, %s124
      %s125 = sphi 0, %s122
      %s126 = sphi 0, %s125
      %s142 = sphi 0, %s126
      %s148 = sphi 0, %s150
      %s151 = sphi 0, %s148
      %s152 = sphi 0, %s151
      %s168 = sphi 0, %s152
      %s176 = sphi 0, %s178
      %s179 = sphi 0, %s176
      %s180 = sphi 0, %s179
      %s196 = sphi 0, %s180
      %s202 = sphi 0, %s204
      %s205 = sphi 0, %s202
      %s206 = sphi 0, %s205
      %s222 = sphi 0, %s206
      %s228 = sphi 0, %s230
      %s231 = sphi 0, %s228
      %s232 = sphi 0, %s231
      %s248 = sphi 0, %s232
      %s254 = sphi 0, %s256
      %s257 = sphi 0, %s254
      %s258 = sphi 0, %s257
      %s274 = sphi 0, %s258
    $region4: #{bayesian_linear.1} parent=1 // loop_header_branch
      %21 = sbr.rel (%p19) target = $region8
    $region5: #{bayesian_linear.1} parent=1 // loop_body
      %s23 = ssub.s32 %s18, 1
      %s24 = ssub.s32 %s18, 2
      %s31 = sadd.s32 1, %s26
      %p32 = scmp.ge.s32.totalorder %s31, 3
      %s33 = scalar_select %p32, 0, %s31
      %s34 = sadd.s32 1, %s25
      %s35 = scalar_select %p32, %s34, %s25
      %p36 = scmp.ge.s32.totalorder %s35, 3
      %s37 = scalar_select %p36, 0, %s35
      %s38 = ssub.s32 %s26, %s33
      %p39 = scmp.eq.s32.totalorder %s38, 0
      %s41 = sadd.s32 %s40, 1
      %s42 = scalar_select %p39, %s40, %s41
      %p45 = pneg %p39
      %p46 = scmp.eq.s32.totalorder %s18, 8
      %p47 = por %p45, %p46
      %p48 = scmp.ne.s32.totalorder %s40, %s43
      %p49 = scmp.eq.s32.totalorder %s18, 0
      %p50 = por %p48, %p49
      %p51 = scmp.ne.s32.totalorder %s40, %s43
      %p52 = scmp.eq.s32.totalorder %s23, 8
      %p53 = por %p51, %p52
      %p54 = scmp.ne.s32.totalorder %s43, %s44
      %p55 = scmp.eq.s32.totalorder %s23, 0
      %p56 = por %p54, %p55
      %p57 = scmp.ne.s32.totalorder %s43, %s44
      %p58 = scmp.eq.s32.totalorder %s24, 8
      %p59 = por %p57, %p58
      %p61 = scmp.ne.s32.totalorder %s44, %s60
      %p62 = scmp.eq.s32.totalorder %s24, 0
      %p63 = por %p61, %p62
      %s64 = ssub.s32 %s26, %s33
      %s65 = ssub.s32 %s25, %s37
      %s66 = sor.u32 %s64, %s65
      %p67 = scmp.eq.s32.totalorder %s66, 0
      %s69 = sadd.s32 %s68, 1
      %s70 = scalar_select %p67, %s68, %s69
      %p73 = pneg %p67
      %p74 = scmp.eq.s32.totalorder %s18, 8
      %p75 = por %p73, %p74
      %p76 = scmp.ne.s32.totalorder %s68, %s71
      %p77 = scmp.eq.s32.totalorder %s18, 0
      %p78 = por %p76, %p77
      %p79 = scmp.ne.s32.totalorder %s68, %s71
      %p80 = scmp.eq.s32.totalorder %s23, 8
      %p81 = por %p79, %p80
      %p82 = scmp.ne.s32.totalorder %s71, %s72
      %p83 = scmp.eq.s32.totalorder %s23, 0
      %p84 = por %p82, %p83
      %p85 = scmp.ne.s32.totalorder %s71, %s72
      %p86 = scmp.eq.s32.totalorder %s24, 8
      %p87 = por %p85, %p86
      %p89 = scmp.ne.s32.totalorder %s72, %s88
      %p90 = scmp.eq.s32.totalorder %s24, 0
      %p91 = por %p89, %p90
      %s92 = ssub.s32 %s26, %s33
      %s93 = ssub.s32 %s25, %s37
      %s94 = sor.u32 %s92, %s93
      %p95 = scmp.eq.s32.totalorder %s94, 0
      %s97 = sadd.s32 %s96, 1
      %s98 = scalar_select %p95, %s96, %s97
      %p101 = pneg %p95
      %p102 = scmp.eq.s32.totalorder %s18, 8
      %p103 = por %p101, %p102
      %p104 = scmp.ne.s32.totalorder %s96, %s99
      %p105 = scmp.eq.s32.totalorder %s18, 0
      %p106 = por %p104, %p105
      %p107 = scmp.ne.s32.totalorder %s96, %s99
      %p108 = scmp.eq.s32.totalorder %s23, 8
      %p109 = por %p107, %p108
      %p110 = scmp.ne.s32.totalorder %s99, %s100
      %p111 = scmp.eq.s32.totalorder %s23, 0
      %p112 = por %p110, %p111
      %p113 = scmp.ne.s32.totalorder %s99, %s100
      %p114 = scmp.eq.s32.totalorder %s24, 8
      %p115 = por %p113, %p114
      %p117 = scmp.ne.s32.totalorder %s100, %s116
      %p118 = scmp.eq.s32.totalorder %s24, 0
      %p119 = por %p117, %p118
      %s120 = ssub.s32 %s25, %s37
      %p121 = scmp.eq.s32.totalorder %s120, 0
      %s123 = sadd.s32 %s122, 1
      %s124 = scalar_select %p121, %s122, %s123
      %p127 = pneg %p121
      %p128 = scmp.eq.s32.totalorder %s18, 8
      %p129 = por %p127, %p128
      %p130 = scmp.ne.s32.totalorder %s122, %s125
      %p131 = scmp.eq.s32.totalorder %s18, 0
      %p132 = por %p130, %p131
      %p133 = scmp.ne.s32.totalorder %s122, %s125
      %p134 = scmp.eq.s32.totalorder %s23, 8
      %p135 = por %p133, %p134
      %p136 = scmp.ne.s32.totalorder %s125, %s126
      %p137 = scmp.eq.s32.totalorder %s23, 0
      %p138 = por %p136, %p137
      %p139 = scmp.ne.s32.totalorder %s125, %s126
      %p140 = scmp.eq.s32.totalorder %s24, 8
      %p141 = por %p139, %p140
      %p143 = scmp.ne.s32.totalorder %s126, %s142
      %p144 = scmp.eq.s32.totalorder %s24, 0
      %p145 = por %p143, %p144
      %s146 = ssub.s32 %s25, %s37
      %p147 = scmp.eq.s32.totalorder %s146, 0
      %s149 = sadd.s32 %s148, 1
      %s150 = scalar_select %p147, %s148, %s149
      %p153 = pneg %p147
      %p154 = scmp.eq.s32.totalorder %s18, 8
      %p155 = por %p153, %p154
      %p156 = scmp.ne.s32.totalorder %s148, %s151
      %p157 = scmp.eq.s32.totalorder %s18, 0
      %p158 = por %p156, %p157
      %p159 = scmp.ne.s32.totalorder %s148, %s151
      %p160 = scmp.eq.s32.totalorder %s23, 8
      %p161 = por %p159, %p160
      %p162 = scmp.ne.s32.totalorder %s151, %s152
      %p163 = scmp.eq.s32.totalorder %s23, 0
      %p164 = por %p162, %p163
      %p165 = scmp.ne.s32.totalorder %s151, %s152
      %p166 = scmp.eq.s32.totalorder %s24, 8
      %p167 = por %p165, %p166
      %p169 = scmp.ne.s32.totalorder %s152, %s168
      %p170 = scmp.eq.s32.totalorder %s24, 0
      %p171 = por %p169, %p170
      %s172 = ssub.s32 %s26, %s33
      %s173 = ssub.s32 %s25, %s37
      %s174 = sor.u32 %s172, %s173
      %p175 = scmp.eq.s32.totalorder %s174, 0
      %s177 = sadd.s32 %s176, 1
      %s178 = scalar_select %p175, %s176, %s177
      %p181 = pneg %p175
      %p182 = scmp.eq.s32.totalorder %s18, 8
      %p183 = por %p181, %p182
      %p184 = scmp.ne.s32.totalorder %s176, %s179
      %p185 = scmp.eq.s32.totalorder %s18, 0
      %p186 = por %p184, %p185
      %p187 = scmp.ne.s32.totalorder %s176, %s179
      %p188 = scmp.eq.s32.totalorder %s23, 8
      %p189 = por %p187, %p188
      %p190 = scmp.ne.s32.totalorder %s179, %s180
      %p191 = scmp.eq.s32.totalorder %s23, 0
      %p192 = por %p190, %p191
      %p193 = scmp.ne.s32.totalorder %s179, %s180
      %p194 = scmp.eq.s32.totalorder %s24, 8
      %p195 = por %p193, %p194
      %p197 = scmp.ne.s32.totalorder %s180, %s196
      %p198 = scmp.eq.s32.totalorder %s24, 0
      %p199 = por %p197, %p198
      %s200 = ssub.s32 %s25, %s37
      %p201 = scmp.eq.s32.totalorder %s200, 0
      %s203 = sadd.s32 %s202, 1
      %s204 = scalar_select %p201, %s202, %s203
      %p207 = pneg %p201
      %p208 = scmp.eq.s32.totalorder %s18, 8
      %p209 = por %p207, %p208
      %p210 = scmp.ne.s32.totalorder %s202, %s205
      %p211 = scmp.eq.s32.totalorder %s18, 0
      %p212 = por %p210, %p211
      %p213 = scmp.ne.s32.totalorder %s202, %s205
      %p214 = scmp.eq.s32.totalorder %s23, 8
      %p215 = por %p213, %p214
      %p216 = scmp.ne.s32.totalorder %s205, %s206
      %p217 = scmp.eq.s32.totalorder %s23, 0
      %p218 = por %p216, %p217
      %p219 = scmp.ne.s32.totalorder %s205, %s206
      %p220 = scmp.eq.s32.totalorder %s24, 8
      %p221 = por %p219, %p220
      %p223 = scmp.ne.s32.totalorder %s206, %s222
      %p224 = scmp.eq.s32.totalorder %s24, 0
      %p225 = por %p223, %p224
      %s226 = ssub.s32 %s25, %s37
      %p227 = scmp.eq.s32.totalorder %s226, 0
      %s229 = sadd.s32 %s228, 1
      %s230 = scalar_select %p227, %s228, %s229
      %p233 = pneg %p227
      %p234 = scmp.eq.s32.totalorder %s18, 8
      %p235 = por %p233, %p234
      %p236 = scmp.ne.s32.totalorder %s228, %s231
      %p237 = scmp.eq.s32.totalorder %s18, 0
      %p238 = por %p236, %p237
      %p239 = scmp.ne.s32.totalorder %s228, %s231
      %p240 = scmp.eq.s32.totalorder %s23, 8
      %p241 = por %p239, %p240
      %p242 = scmp.ne.s32.totalorder %s231, %s232
      %p243 = scmp.eq.s32.totalorder %s23, 0
      %p244 = por %p242, %p243
      %p245 = scmp.ne.s32.totalorder %s231, %s232
      %p246 = scmp.eq.s32.totalorder %s24, 8
      %p247 = por %p245, %p246
      %p249 = scmp.ne.s32.totalorder %s232, %s248
      %p250 = scmp.eq.s32.totalorder %s24, 0
      %p251 = por %p249, %p250
      %s252 = ssub.s32 %s25, %s37
      %p253 = scmp.eq.s32.totalorder %s252, 0
      %s255 = sadd.s32 %s254, 1
      %s256 = scalar_select %p253, %s254, %s255
      %p259 = pneg %p253
      %p260 = scmp.eq.s32.totalorder %s18, 8
      %p261 = por %p259, %p260
      %p262 = scmp.ne.s32.totalorder %s254, %s257
      %p263 = scmp.eq.s32.totalorder %s18, 0
      %p264 = por %p262, %p263
      %p265 = scmp.ne.s32.totalorder %s254, %s257
      %p266 = scmp.eq.s32.totalorder %s23, 8
      %p267 = por %p265, %p266
      %p268 = scmp.ne.s32.totalorder %s257, %s258
      %p269 = scmp.eq.s32.totalorder %s23, 0
      %p270 = por %p268, %p269
      %p271 = scmp.ne.s32.totalorder %s257, %s258
      %p272 = scmp.eq.s32.totalorder %s24, 8
      %p273 = por %p271, %p272
      %p275 = scmp.ne.s32.totalorder %s258, %s274
      %p276 = scmp.eq.s32.totalorder %s24, 0
      %p277 = por %p275, %p276
      %p278 = scmp.le.s32.totalorder 1, %s18
      %p279 = scmp.lt.s32.totalorder %s18, 10
      %p280 = pnand %p278, %p279
      %p281 = pneg %p280
      // Predicated region
      $region9: #{bayesian_linear.1} parent=5 // pred_check
        _
      $region10: #{bayesian_linear.1} parent=5 // pred_check_branch
        %283 = sbr.rel (%p280) target = $region12
      $region11: #{bayesian_linear.1} parent=5 // pred_region
        %s284 = ssub.s32 %s18, 1
      $region12: #{bayesian_linear.1} parent=5 // pred_fallthru
        _
      %p285 = scmp.lt.s32.totalorder %s18, 9
      // Predicated region
      $region13: #{bayesian_linear.1} parent=5 // pred_check
        %p286 = pneg %p285
      $region14: #{bayesian_linear.1} parent=5 // pred_check_branch
        %288 = sbr.rel (%p286) target = $region16
      $region15: #{bayesian_linear.1} parent=5 // pred_region
        // Predicated region
        $region17: #{bayesian_linear.1} parent=15 // pred_check
          %p289 = pneg %p50
        $region18: #{bayesian_linear.1} parent=15 // pred_check_branch
          %291 = sbr.rel (%p289) target = $region20
        $region19: #{bayesian_linear.1} parent=15 // pred_region
          %p292 = scmp.lt.s32.totalorder %s26, 2
          %s293 = scalar_select %p292, %s26, 2
          %s294 = smul.addr %s293, 8
          %s295 = scalar_lea.vmem %s0, %s294
        $region20: #{bayesian_linear.1} parent=15 // pred_fallthru
          _
        // Predicated region
        $region21: #{bayesian_linear.1} parent=15 // pred_check
          %p296 = pneg %p78
        $region22: #{bayesian_linear.1} parent=15 // pred_check_branch
          %298 = sbr.rel (%p296) target = $region24
        $region23: #{bayesian_linear.1} parent=15 // pred_region
          %s299 = sand.u32 %s68, 1
          %s300 = sand.u32 %s68, 1
          %s301 = smul.addr %s300, 128
          %s302 = scalar_lea.vmem [#allocation3], %s301
          %s303 = smul.u32 16, %s26
          %s304 = smul.addr %s303, 3
          %s305 = sadd.s32 %s25, %s304
          %s306 = smul.addr %s305, 8
          %s307 = scalar_lea.vmem %s1, %s306
          // Predicated region
          $region25: #{bayesian_linear.1} parent=23 // pred_check
            _
          $region26: #{bayesian_linear.1} parent=23 // pred_check_branch
            %309 = sbr.rel (0) target = $region28
          $region27: #{bayesian_linear.1} parent=23 // pred_region
            // Predicated region
            $region29: #{bayesian_linear.1} parent=27 // pred_check
              _
            $region30: #{bayesian_linear.1} parent=27 // pred_check_branch
              %311 = sbr.rel (0) target = $region32
            $region31: #{bayesian_linear.1} parent=27 // pred_region
              // Predicated region
              $region44: #{bayesian_linear.1} parent=31 // pred_check
                _
              $region45: #{bayesian_linear.1} parent=31 // pred_check_branch
                %356 = sbr.rel (0) target = $region47
              $region46: #{bayesian_linear.1} parent=31 // pred_region
                loop: start=0, step=1, limit=1
                $region48: #{bayesian_linear.1} parent=46 // loop_pre_header
                  _
                $region49: #{bayesian_linear.1} parent=46 // loop_header
                  %s358 = sphi 0, %s362
                  %p359 = scmp.ge.s32.totalorder %s358, 1
                  %s363 = sphi %s307, %s307
                  %s364 = sphi %s302, %s302
                $region50: #{bayesian_linear.1} parent=46 // loop_header_branch
                  %361 = sbr.rel (%p359) target = $region54
                $region51: #{bayesian_linear.1} parent=46 // loop_body
                  %v365 = vld [vmem:[%s363] sm:$0xff]
                  %366 = vst [vmem:[%s364] sm:$0xff] %v365
                  %v367 = vld [vmem:[%s363 + $0x18] sm:$0xff]
                  %368 = vst [vmem:[%s364 + $0x8] sm:$0xff] %v367
                  %v369 = vld [vmem:[%s363 + $0x30] sm:$0xff]
                  %370 = vst [vmem:[%s364 + $0x10] sm:$0xff] %v369
                  %v371 = vld [vmem:[%s363 + $0x48] sm:$0xff]
                  %372 = vst [vmem:[%s364 + $0x18] sm:$0xff] %v371
                  %v373 = vld [vmem:[%s363 + $0x60] sm:$0xff]
                  %374 = vst [vmem:[%s364 + $0x20] sm:$0xff] %v373
                  %v375 = vld [vmem:[%s363 + $0x78] sm:$0xff]
                  %376 = vst [vmem:[%s364 + $0x28] sm:$0xff] %v375
                  %v377 = vld [vmem:[%s363 + $0x90] sm:$0xff]
                  %378 = vst [vmem:[%s364 + $0x30] sm:$0xff] %v377
                  %v379 = vld [vmem:[%s363 + $0xa8] sm:$0xff]
                  %380 = vst [vmem:[%s364 + $0x38] sm:$0xff] %v379
                  %v381 = vld [vmem:[%s363 + $0xc0] sm:$0xff]
                  %382 = vst [vmem:[%s364 + $0x40] sm:$0xff] %v381
                  %v383 = vld [vmem:[%s363 + $0xd8] sm:$0xff]
                  %384 = vst [vmem:[%s364 + $0x48] sm:$0xff] %v383
                  %v385 = vld [vmem:[%s363 + $0xf0] sm:$0xff]
                  %386 = vst [vmem:[%s364 + $0x50] sm:$0xff] %v385
                  %v387 = vld [vmem:[%s363 + $0x108] sm:$0xff]
                  %388 = vst [vmem:[%s364 + $0x58] sm:$0xff] %v387
                  %v389 = vld [vmem:[%s363 + $0x120] sm:$0xff]
                  %390 = vst [vmem:[%s364 + $0x60] sm:$0xff] %v389
                  %v391 = vld [vmem:[%s363 + $0x138] sm:$0xff]
                  %392 = vst [vmem:[%s364 + $0x68] sm:$0xff] %v391
                  %v393 = vld [vmem:[%s363 + $0x150] sm:$0xff]
                  %394 = vst [vmem:[%s364 + $0x70] sm:$0xff] %v393
                  %v395 = vld [vmem:[%s363 + $0x168] sm:$0xff]
                  %396 = vst [vmem:[%s364 + $0x78] sm:$0xff] %v395
                $region52: #{bayesian_linear.1} parent=46 // loop_footer
                  %s362 = sadd.s32 1, %s358
                $region53: #{bayesian_linear.1} parent=46 // loop_footer_branch
                  %357 = sbr.rel target = $region49
                $region54: #{bayesian_linear.1} parent=46 // loop_exit
                  _
              $region47: #{bayesian_linear.1} parent=31 // pred_fallthru
                _
              // Predicated region
              $region55: #{bayesian_linear.1} parent=31 // pred_check
                _
              $region56: #{bayesian_linear.1} parent=31 // pred_check_branch
                %398 = sbr.rel target = $region58
              $region57: #{bayesian_linear.1} parent=31 // pred_region
                _
              $region58: #{bayesian_linear.1} parent=31 // pred_fallthru
                _
            $region32: #{bayesian_linear.1} parent=27 // pred_fallthru
              _
            // Predicated region
            $region33: #{bayesian_linear.1} parent=27 // pred_check
              _
            $region34: #{bayesian_linear.1} parent=27 // pred_check_branch
              %313 = sbr.rel target = $region36
            $region35: #{bayesian_linear.1} parent=27 // pred_region
              loop: start=0, step=1, limit=1
              $region37: #{bayesian_linear.1} parent=35 // loop_pre_header
                _
              $region38: #{bayesian_linear.1} parent=35 // loop_header
                %s316 = sphi 0, %s320
                %p317 = scmp.ge.s32.totalorder %s316, 1
                %s321 = sphi %s307, %s307
                %s322 = sphi %s302, %s302
              $region39: #{bayesian_linear.1} parent=35 // loop_header_branch
                %319 = sbr.rel (%p317) target = $region43
              $region40: #{bayesian_linear.1} parent=35 // loop_body
                %v323 = vld [vmem:[%s321] sm:$0xff]
                %324 = vst [vmem:[%s322] sm:$0xff] %v323
                %v325 = vld [vmem:[%s321 + $0x18] sm:$0xff]
                %326 = vst [vmem:[%s322 + $0x8] sm:$0xff] %v325
                %v327 = vld [vmem:[%s321 + $0x30] sm:$0xff]
                %328 = vst [vmem:[%s322 + $0x10] sm:$0xff] %v327
                %v329 = vld [vmem:[%s321 + $0x48] sm:$0xff]
                %330 = vst [vmem:[%s322 + $0x18] sm:$0xff] %v329
                %v331 = vld [vmem:[%s321 + $0x60] sm:$0xff]
                %332 = vst [vmem:[%s322 + $0x20] sm:$0xff] %v331
                %v333 = vld [vmem:[%s321 + $0x78] sm:$0xff]
                %334 = vst [vmem:[%s322 + $0x28] sm:$0xff] %v333
                %v335 = vld [vmem:[%s321 + $0x90] sm:$0xff]
                %336 = vst [vmem:[%s322 + $0x30] sm:$0xff] %v335
                %v337 = vld [vmem:[%s321 + $0xa8] sm:$0xff]
                %338 = vst [vmem:[%s322 + $0x38] sm:$0xff] %v337
                %v339 = vld [vmem:[%s321 + $0xc0] sm:$0xff]
                %340 = vst [vmem:[%s322 + $0x40] sm:$0xff] %v339
                %v341 = vld [vmem:[%s321 + $0xd8] sm:$0xff]
                %342 = vst [vmem:[%s322 + $0x48] sm:$0xff] %v341
                %v343 = vld [vmem:[%s321 + $0xf0] sm:$0xff]
                %344 = vst [vmem:[%s322 + $0x50] sm:$0xff] %v343
                %v345 = vld [vmem:[%s321 + $0x108] sm:$0xff]
                %346 = vst [vmem:[%s322 + $0x58] sm:$0xff] %v345
                %v347 = vld [vmem:[%s321 + $0x120] sm:$0xff]
                %348 = vst [vmem:[%s322 + $0x60] sm:$0xff] %v347
                %v349 = vld [vmem:[%s321 + $0x138] sm:$0xff]
                %350 = vst [vmem:[%s322 + $0x68] sm:$0xff] %v349
                %v351 = vld [vmem:[%s321 + $0x150] sm:$0xff]
                %352 = vst [vmem:[%s322 + $0x70] sm:$0xff] %v351
                %v353 = vld [vmem:[%s321 + $0x168] sm:$0xff]
                %354 = vst [vmem:[%s322 + $0x78] sm:$0xff] %v353
              $region41: #{bayesian_linear.1} parent=35 // loop_footer
                %s320 = sadd.s32 1, %s316
              $region42: #{bayesian_linear.1} parent=35 // loop_footer_branch
                %315 = sbr.rel target = $region38
              $region43: #{bayesian_linear.1} parent=35 // loop_exit
                _
            $region36: #{bayesian_linear.1} parent=27 // pred_fallthru
              _
          $region28: #{bayesian_linear.1} parent=23 // pred_fallthru
            _
          %399 = vnop
        $region24: #{bayesian_linear.1} parent=15 // pred_fallthru
          _
        // Predicated region
        $region59: #{bayesian_linear.1} parent=15 // pred_check
          %p400 = pneg %p106
        $region60: #{bayesian_linear.1} parent=15 // pred_check_branch
          %402 = sbr.rel (%p400) target = $region62
        $region61: #{bayesian_linear.1} parent=15 // pred_region
          %s403 = sand.u32 %s96, 1
          %s404 = sand.u32 %s96, 1
          %s405 = smul.addr %s404, 128
          %s406 = scalar_lea.vmem [#allocation4], %s405
          %s407 = smul.u32 16, %s26
          %s408 = smul.addr %s407, 3
          %s409 = sadd.s32 %s25, %s408
          %s410 = smul.addr %s409, 8
          %s411 = scalar_lea.vmem %s2, %s410
          // Predicated region
          $region63: #{bayesian_linear.1} parent=61 // pred_check
            _
          $region64: #{bayesian_linear.1} parent=61 // pred_check_branch
            %413 = sbr.rel (0) target = $region66
          $region65: #{bayesian_linear.1} parent=61 // pred_region
            // Predicated region
            $region67: #{bayesian_linear.1} parent=65 // pred_check
              _
            $region68: #{bayesian_linear.1} parent=65 // pred_check_branch
              %415 = sbr.rel (0) target = $region70
            $region69: #{bayesian_linear.1} parent=65 // pred_region
              // Predicated region
              $region82: #{bayesian_linear.1} parent=69 // pred_check
                _
              $region83: #{bayesian_linear.1} parent=69 // pred_check_branch
                %460 = sbr.rel (0) target = $region85
              $region84: #{bayesian_linear.1} parent=69 // pred_region
                loop: start=0, step=1, limit=1
                $region86: #{bayesian_linear.1} parent=84 // loop_pre_header
                  _
                $region87: #{bayesian_linear.1} parent=84 // loop_header
                  %s462 = sphi 0, %s466
                  %p463 = scmp.ge.s32.totalorder %s462, 1
                  %s467 = sphi %s411, %s411
                  %s468 = sphi %s406, %s406
                $region88: #{bayesian_linear.1} parent=84 // loop_header_branch
                  %465 = sbr.rel (%p463) target = $region92
                $region89: #{bayesian_linear.1} parent=84 // loop_body
                  %v469 = vld [vmem:[%s467] sm:$0xff]
                  %470 = vst [vmem:[%s468] sm:$0xff] %v469
                  %v471 = vld [vmem:[%s467 + $0x18] sm:$0xff]
                  %472 = vst [vmem:[%s468 + $0x8] sm:$0xff] %v471
                  %v473 = vld [vmem:[%s467 + $0x30] sm:$0xff]
                  %474 = vst [vmem:[%s468 + $0x10] sm:$0xff] %v473
                  %v475 = vld [vmem:[%s467 + $0x48] sm:$0xff]
                  %476 = vst [vmem:[%s468 + $0x18] sm:$0xff] %v475
                  %v477 = vld [vmem:[%s467 + $0x60] sm:$0xff]
                  %478 = vst [vmem:[%s468 + $0x20] sm:$0xff] %v477
                  %v479 = vld [vmem:[%s467 + $0x78] sm:$0xff]
                  %480 = vst [vmem:[%s468 + $0x28] sm:$0xff] %v479
                  %v481 = vld [vmem:[%s467 + $0x90] sm:$0xff]
                  %482 = vst [vmem:[%s468 + $0x30] sm:$0xff] %v481
                  %v483 = vld [vmem:[%s467 + $0xa8] sm:$0xff]
                  %484 = vst [vmem:[%s468 + $0x38] sm:$0xff] %v483
                  %v485 = vld [vmem:[%s467 + $0xc0] sm:$0xff]
                  %486 = vst [vmem:[%s468 + $0x40] sm:$0xff] %v485
                  %v487 = vld [vmem:[%s467 + $0xd8] sm:$0xff]
                  %488 = vst [vmem:[%s468 + $0x48] sm:$0xff] %v487
                  %v489 = vld [vmem:[%s467 + $0xf0] sm:$0xff]
                  %490 = vst [vmem:[%s468 + $0x50] sm:$0xff] %v489
                  %v491 = vld [vmem:[%s467 + $0x108] sm:$0xff]
                  %492 = vst [vmem:[%s468 + $0x58] sm:$0xff] %v491
                  %v493 = vld [vmem:[%s467 + $0x120] sm:$0xff]
                  %494 = vst [vmem:[%s468 + $0x60] sm:$0xff] %v493
                  %v495 = vld [vmem:[%s467 + $0x138] sm:$0xff]
                  %496 = vst [vmem:[%s468 + $0x68] sm:$0xff] %v495
                  %v497 = vld [vmem:[%s467 + $0x150] sm:$0xff]
                  %498 = vst [vmem:[%s468 + $0x70] sm:$0xff] %v497
                  %v499 = vld [vmem:[%s467 + $0x168] sm:$0xff]
                  %500 = vst [vmem:[%s468 + $0x78] sm:$0xff] %v499
                $region90: #{bayesian_linear.1} parent=84 // loop_footer
                  %s466 = sadd.s32 1, %s462
                $region91: #{bayesian_linear.1} parent=84 // loop_footer_branch
                  %461 = sbr.rel target = $region87
                $region92: #{bayesian_linear.1} parent=84 // loop_exit
                  _
              $region85: #{bayesian_linear.1} parent=69 // pred_fallthru
                _
              // Predicated region
              $region93: #{bayesian_linear.1} parent=69 // pred_check
                _
              $region94: #{bayesian_linear.1} parent=69 // pred_check_branch
                %502 = sbr.rel target = $region96
              $region95: #{bayesian_linear.1} parent=69 // pred_region
                _
              $region96: #{bayesian_linear.1} parent=69 // pred_fallthru
                _
            $region70: #{bayesian_linear.1} parent=65 // pred_fallthru
              _
            // Predicated region
            $region71: #{bayesian_linear.1} parent=65 // pred_check
              _
            $region72: #{bayesian_linear.1} parent=65 // pred_check_branch
              %417 = sbr.rel target = $region74
            $region73: #{bayesian_linear.1} parent=65 // pred_region
              loop: start=0, step=1, limit=1
              $region75: #{bayesian_linear.1} parent=73 // loop_pre_header
                _
              $region76: #{bayesian_linear.1} parent=73 // loop_header
                %s420 = sphi 0, %s424
                %p421 = scmp.ge.s32.totalorder %s420, 1
                %s425 = sphi %s411, %s411
                %s426 = sphi %s406, %s406
              $region77: #{bayesian_linear.1} parent=73 // loop_header_branch
                %423 = sbr.rel (%p421) target = $region81
              $region78: #{bayesian_linear.1} parent=73 // loop_body
                %v427 = vld [vmem:[%s425] sm:$0xff]
                %428 = vst [vmem:[%s426] sm:$0xff] %v427
                %v429 = vld [vmem:[%s425 + $0x18] sm:$0xff]
                %430 = vst [vmem:[%s426 + $0x8] sm:$0xff] %v429
                %v431 = vld [vmem:[%s425 + $0x30] sm:$0xff]
                %432 = vst [vmem:[%s426 + $0x10] sm:$0xff] %v431
                %v433 = vld [vmem:[%s425 + $0x48] sm:$0xff]
                %434 = vst [vmem:[%s426 + $0x18] sm:$0xff] %v433
                %v435 = vld [vmem:[%s425 + $0x60] sm:$0xff]
                %436 = vst [vmem:[%s426 + $0x20] sm:$0xff] %v435
                %v437 = vld [vmem:[%s425 + $0x78] sm:$0xff]
                %438 = vst [vmem:[%s426 + $0x28] sm:$0xff] %v437
                %v439 = vld [vmem:[%s425 + $0x90] sm:$0xff]
                %440 = vst [vmem:[%s426 + $0x30] sm:$0xff] %v439
                %v441 = vld [vmem:[%s425 + $0xa8] sm:$0xff]
                %442 = vst [vmem:[%s426 + $0x38] sm:$0xff] %v441
                %v443 = vld [vmem:[%s425 + $0xc0] sm:$0xff]
                %444 = vst [vmem:[%s426 + $0x40] sm:$0xff] %v443
                %v445 = vld [vmem:[%s425 + $0xd8] sm:$0xff]
                %446 = vst [vmem:[%s426 + $0x48] sm:$0xff] %v445
                %v447 = vld [vmem:[%s425 + $0xf0] sm:$0xff]
                %448 = vst [vmem:[%s426 + $0x50] sm:$0xff] %v447
                %v449 = vld [vmem:[%s425 + $0x108] sm:$0xff]
                %450 = vst [vmem:[%s426 + $0x58] sm:$0xff] %v449
                %v451 = vld [vmem:[%s425 + $0x120] sm:$0xff]
                %452 = vst [vmem:[%s426 + $0x60] sm:$0xff] %v451
                %v453 = vld [vmem:[%s425 + $0x138] sm:$0xff]
                %454 = vst [vmem:[%s426 + $0x68] sm:$0xff] %v453
                %v455 = vld [vmem:[%s425 + $0x150] sm:$0xff]
                %456 = vst [vmem:[%s426 + $0x70] sm:$0xff] %v455
                %v457 = vld [vmem:[%s425 + $0x168] sm:$0xff]
                %458 = vst [vmem:[%s426 + $0x78] sm:$0xff] %v457
              $region79: #{bayesian_linear.1} parent=73 // loop_footer
                %s424 = sadd.s32 1, %s420
              $region80: #{bayesian_linear.1} parent=73 // loop_footer_branch
                %419 = sbr.rel target = $region76
              $region81: #{bayesian_linear.1} parent=73 // loop_exit
                _
            $region74: #{bayesian_linear.1} parent=65 // pred_fallthru
              _
          $region66: #{bayesian_linear.1} parent=61 // pred_fallthru
            _
          %503 = vnop
        $region62: #{bayesian_linear.1} parent=15 // pred_fallthru
          _
        // Predicated region
        $region97: #{bayesian_linear.1} parent=15 // pred_check
          %p504 = pneg %p132
        $region98: #{bayesian_linear.1} parent=15 // pred_check_branch
          %506 = sbr.rel (%p504) target = $region100
        $region99: #{bayesian_linear.1} parent=15 // pred_region
          %p507 = scmp.lt.s32.totalorder %s25, 2
          %s508 = scalar_select %p507, %s25, 2
          %s509 = scalar_lea.vmem %s3, %s508
        $region100: #{bayesian_linear.1} parent=15 // pred_fallthru
          _
        // Predicated region
        $region101: #{bayesian_linear.1} parent=15 // pred_check
          %p510 = pneg %p158
        $region102: #{bayesian_linear.1} parent=15 // pred_check_branch
          %512 = sbr.rel (%p510) target = $region104
        $region103: #{bayesian_linear.1} parent=15 // pred_region
          %p513 = scmp.lt.s32.totalorder %s25, 2
          %s514 = scalar_select %p513, %s25, 2
          %s515 = scalar_lea.vmem %s4, %s514
        $region104: #{bayesian_linear.1} parent=15 // pred_fallthru
          _
        // Predicated region
        $region105: #{bayesian_linear.1} parent=15 // pred_check
          %p516 = pneg %p186
        $region106: #{bayesian_linear.1} parent=15 // pred_check_branch
          %518 = sbr.rel (%p516) target = $region108
        $region107: #{bayesian_linear.1} parent=15 // pred_region
          %s519 = sand.u32 %s176, 1
          %s520 = sand.u32 %s176, 1
          %s521 = smul.addr %s520, 128
          %s522 = scalar_lea.vmem [#allocation5], %s521
          %s523 = smul.u32 16, %s26
          %s524 = smul.addr %s523, 3
          %s525 = sadd.s32 %s25, %s524
          %s526 = smul.addr %s525, 8
          %s527 = scalar_lea.vmem %s5, %s526
          // Predicated region
          $region109: #{bayesian_linear.1} parent=107 // pred_check
            _
          $region110: #{bayesian_linear.1} parent=107 // pred_check_branch
            %529 = sbr.rel (0) target = $region112
          $region111: #{bayesian_linear.1} parent=107 // pred_region
            // Predicated region
            $region113: #{bayesian_linear.1} parent=111 // pred_check
              _
            $region114: #{bayesian_linear.1} parent=111 // pred_check_branch
              %531 = sbr.rel (0) target = $region116
            $region115: #{bayesian_linear.1} parent=111 // pred_region
              // Predicated region
              $region128: #{bayesian_linear.1} parent=115 // pred_check
                _
              $region129: #{bayesian_linear.1} parent=115 // pred_check_branch
                %576 = sbr.rel (0) target = $region131
              $region130: #{bayesian_linear.1} parent=115 // pred_region
                loop: start=0, step=1, limit=1
                $region132: #{bayesian_linear.1} parent=130 // loop_pre_header
                  _
                $region133: #{bayesian_linear.1} parent=130 // loop_header
                  %s578 = sphi 0, %s582
                  %p579 = scmp.ge.s32.totalorder %s578, 1
                  %s583 = sphi %s527, %s527
                  %s584 = sphi %s522, %s522
                $region134: #{bayesian_linear.1} parent=130 // loop_header_branch
                  %581 = sbr.rel (%p579) target = $region138
                $region135: #{bayesian_linear.1} parent=130 // loop_body
                  %v585 = vld [vmem:[%s583] sm:$0xff]
                  %586 = vst [vmem:[%s584] sm:$0xff] %v585
                  %v587 = vld [vmem:[%s583 + $0x18] sm:$0xff]
                  %588 = vst [vmem:[%s584 + $0x8] sm:$0xff] %v587
                  %v589 = vld [vmem:[%s583 + $0x30] sm:$0xff]
                  %590 = vst [vmem:[%s584 + $0x10] sm:$0xff] %v589
                  %v591 = vld [vmem:[%s583 + $0x48] sm:$0xff]
                  %592 = vst [vmem:[%s584 + $0x18] sm:$0xff] %v591
                  %v593 = vld [vmem:[%s583 + $0x60] sm:$0xff]
                  %594 = vst [vmem:[%s584 + $0x20] sm:$0xff] %v593
                  %v595 = vld [vmem:[%s583 + $0x78] sm:$0xff]
                  %596 = vst [vmem:[%s584 + $0x28] sm:$0xff] %v595
                  %v597 = vld [vmem:[%s583 + $0x90] sm:$0xff]
                  %598 = vst [vmem:[%s584 + $0x30] sm:$0xff] %v597
                  %v599 = vld [vmem:[%s583 + $0xa8] sm:$0xff]
                  %600 = vst [vmem:[%s584 + $0x38] sm:$0xff] %v599
                  %v601 = vld [vmem:[%s583 + $0xc0] sm:$0xff]
                  %602 = vst [vmem:[%s584 + $0x40] sm:$0xff] %v601
                  %v603 = vld [vmem:[%s583 + $0xd8] sm:$0xff]
                  %604 = vst [vmem:[%s584 + $0x48] sm:$0xff] %v603
                  %v605 = vld [vmem:[%s583 + $0xf0] sm:$0xff]
                  %606 = vst [vmem:[%s584 + $0x50] sm:$0xff] %v605
                  %v607 = vld [vmem:[%s583 + $0x108] sm:$0xff]
                  %608 = vst [vmem:[%s584 + $0x58] sm:$0xff] %v607
                  %v609 = vld [vmem:[%s583 + $0x120] sm:$0xff]
                  %610 = vst [vmem:[%s584 + $0x60] sm:$0xff] %v609
                  %v611 = vld [vmem:[%s583 + $0x138] sm:$0xff]
                  %612 = vst [vmem:[%s584 + $0x68] sm:$0xff] %v611
                  %v613 = vld [vmem:[%s583 + $0x150] sm:$0xff]
                  %614 = vst [vmem:[%s584 + $0x70] sm:$0xff] %v613
                  %v615 = vld [vmem:[%s583 + $0x168] sm:$0xff]
                  %616 = vst [vmem:[%s584 + $0x78] sm:$0xff] %v615
                $region136: #{bayesian_linear.1} parent=130 // loop_footer
                  %s582 = sadd.s32 1, %s578
                $region137: #{bayesian_linear.1} parent=130 // loop_footer_branch
                  %577 = sbr.rel target = $region133
                $region138: #{bayesian_linear.1} parent=130 // loop_exit
                  _
              $region131: #{bayesian_linear.1} parent=115 // pred_fallthru
                _
              // Predicated region
              $region139: #{bayesian_linear.1} parent=115 // pred_check
                _
              $region140: #{bayesian_linear.1} parent=115 // pred_check_branch
                %618 = sbr.rel target = $region142
              $region141: #{bayesian_linear.1} parent=115 // pred_region
                _
              $region142: #{bayesian_linear.1} parent=115 // pred_fallthru
                _
            $region116: #{bayesian_linear.1} parent=111 // pred_fallthru
              _
            // Predicated region
            $region117: #{bayesian_linear.1} parent=111 // pred_check
              _
            $region118: #{bayesian_linear.1} parent=111 // pred_check_branch
              %533 = sbr.rel target = $region120
            $region119: #{bayesian_linear.1} parent=111 // pred_region
              loop: start=0, step=1, limit=1
              $region121: #{bayesian_linear.1} parent=119 // loop_pre_header
                _
              $region122: #{bayesian_linear.1} parent=119 // loop_header
                %s536 = sphi 0, %s540
                %p537 = scmp.ge.s32.totalorder %s536, 1
                %s541 = sphi %s527, %s527
                %s542 = sphi %s522, %s522
              $region123: #{bayesian_linear.1} parent=119 // loop_header_branch
                %539 = sbr.rel (%p537) target = $region127
              $region124: #{bayesian_linear.1} parent=119 // loop_body
                %v543 = vld [vmem:[%s541] sm:$0xff]
                %544 = vst [vmem:[%s542] sm:$0xff] %v543
                %v545 = vld [vmem:[%s541 + $0x18] sm:$0xff]
                %546 = vst [vmem:[%s542 + $0x8] sm:$0xff] %v545
                %v547 = vld [vmem:[%s541 + $0x30] sm:$0xff]
                %548 = vst [vmem:[%s542 + $0x10] sm:$0xff] %v547
                %v549 = vld [vmem:[%s541 + $0x48] sm:$0xff]
                %550 = vst [vmem:[%s542 + $0x18] sm:$0xff] %v549
                %v551 = vld [vmem:[%s541 + $0x60] sm:$0xff]
                %552 = vst [vmem:[%s542 + $0x20] sm:$0xff] %v551
                %v553 = vld [vmem:[%s541 + $0x78] sm:$0xff]
                %554 = vst [vmem:[%s542 + $0x28] sm:$0xff] %v553
                %v555 = vld [vmem:[%s541 + $0x90] sm:$0xff]
                %556 = vst [vmem:[%s542 + $0x30] sm:$0xff] %v555
                %v557 = vld [vmem:[%s541 + $0xa8] sm:$0xff]
                %558 = vst [vmem:[%s542 + $0x38] sm:$0xff] %v557
                %v559 = vld [vmem:[%s541 + $0xc0] sm:$0xff]
                %560 = vst [vmem:[%s542 + $0x40] sm:$0xff] %v559
                %v561 = vld [vmem:[%s541 + $0xd8] sm:$0xff]
                %562 = vst [vmem:[%s542 + $0x48] sm:$0xff] %v561
                %v563 = vld [vmem:[%s541 + $0xf0] sm:$0xff]
                %564 = vst [vmem:[%s542 + $0x50] sm:$0xff] %v563
                %v565 = vld [vmem:[%s541 + $0x108] sm:$0xff]
                %566 = vst [vmem:[%s542 + $0x58] sm:$0xff] %v565
                %v567 = vld [vmem:[%s541 + $0x120] sm:$0xff]
                %568 = vst [vmem:[%s542 + $0x60] sm:$0xff] %v567
                %v569 = vld [vmem:[%s541 + $0x138] sm:$0xff]
                %570 = vst [vmem:[%s542 + $0x68] sm:$0xff] %v569
                %v571 = vld [vmem:[%s541 + $0x150] sm:$0xff]
                %572 = vst [vmem:[%s542 + $0x70] sm:$0xff] %v571
                %v573 = vld [vmem:[%s541 + $0x168] sm:$0xff]
                %574 = vst [vmem:[%s542 + $0x78] sm:$0xff] %v573
              $region125: #{bayesian_linear.1} parent=119 // loop_footer
                %s540 = sadd.s32 1, %s536
              $region126: #{bayesian_linear.1} parent=119 // loop_footer_branch
                %535 = sbr.rel target = $region122
              $region127: #{bayesian_linear.1} parent=119 // loop_exit
                _
            $region120: #{bayesian_linear.1} parent=111 // pred_fallthru
              _
          $region112: #{bayesian_linear.1} parent=107 // pred_fallthru
            _
          %619 = vnop
        $region108: #{bayesian_linear.1} parent=15 // pred_fallthru
          _
        // Predicated region
        $region143: #{bayesian_linear.1} parent=15 // pred_check
          %p620 = pneg %p212
        $region144: #{bayesian_linear.1} parent=15 // pred_check_branch
          %622 = sbr.rel (%p620) target = $region146
        $region145: #{bayesian_linear.1} parent=15 // pred_region
          %p623 = scmp.lt.s32.totalorder %s25, 2
          %s624 = scalar_select %p623, %s25, 2
          %s625 = scalar_lea.vmem %s6, %s624
        $region146: #{bayesian_linear.1} parent=15 // pred_fallthru
          _
      $region16: #{bayesian_linear.1} parent=5 // pred_fallthru
        _
      %p626 = scmp.le.s32.totalorder 1, %s18
      %p627 = scmp.lt.s32.totalorder %s18, 10
      %p628 = pnand %p626, %p627
      %p629 = pneg %p628
      // Predicated region
      $region147: #{bayesian_linear.1} parent=5 // pred_check
        _
      $region148: #{bayesian_linear.1} parent=5 // pred_check_branch
        %631 = sbr.rel (%p628) target = $region150
      $region149: #{bayesian_linear.1} parent=5 // pred_region
        %s632 = ssub.s32 %s18, 1
        %s633 = sand.u32 %s71, 1
        %s634 = sand.u32 %s71, 1
        %s635 = smul.addr %s634, 128
        %s636 = scalar_lea.vmem [#allocation3], %s635
        // Predicated region
        $region151: #{bayesian_linear.1} parent=149 // pred_check
          %p637 = pneg %p84
        $region152: #{bayesian_linear.1} parent=149 // pred_check_branch
          %639 = sbr.rel (%p637) target = $region154
        $region153: #{bayesian_linear.1} parent=149 // pred_region
          _
        $region154: #{bayesian_linear.1} parent=149 // pred_fallthru
          _
        %s640 = sand.u32 %s99, 1
        %s641 = sand.u32 %s99, 1
        %s642 = smul.addr %s641, 128
        %s643 = scalar_lea.vmem [#allocation4], %s642
        // Predicated region
        $region155: #{bayesian_linear.1} parent=149 // pred_check
          %p644 = pneg %p112
        $region156: #{bayesian_linear.1} parent=149 // pred_check_branch
          %646 = sbr.rel (%p644) target = $region158
        $region157: #{bayesian_linear.1} parent=149 // pred_region
          _
        $region158: #{bayesian_linear.1} parent=149 // pred_fallthru
          _
        %s647 = sand.u32 %s179, 1
        %s648 = sand.u32 %s179, 1
        %s649 = smul.addr %s648, 128
        %s650 = scalar_lea.vmem [#allocation5], %s649
        // Predicated region
        $region159: #{bayesian_linear.1} parent=149 // pred_check
          %p651 = pneg %p192
        $region160: #{bayesian_linear.1} parent=149 // pred_check_branch
          %653 = sbr.rel (%p651) target = $region162
        $region161: #{bayesian_linear.1} parent=149 // pred_region
          _
        $region162: #{bayesian_linear.1} parent=149 // pred_fallthru
          _
        %p654 = scmp.lt.s32.totalorder %s28, 2
        %s655 = scalar_select %p654, %s28, 2
        %s656 = smul.addr %s655, 8
        %s657 = scalar_lea.vmem %s0, %s656
        %p658 = pneg %p56
        %p659 = pneg %p53
        %s660 = sand.u32 %s71, 1
        %s661 = sand.u32 %s71, 1
        %s662 = smul.addr %s661, 128
        %s663 = scalar_lea.vmem [#allocation3], %s662
        %p664 = pneg %p84
        %p665 = pneg %p81
        %s666 = sand.u32 %s99, 1
        %s667 = sand.u32 %s99, 1
        %s668 = smul.addr %s667, 128
        %s669 = scalar_lea.vmem [#allocation4], %s668
        %p670 = pneg %p112
        %p671 = pneg %p109
        %p672 = scmp.lt.s32.totalorder %s27, 2
        %s673 = scalar_select %p672, %s27, 2
        %s674 = scalar_lea.vmem %s3, %s673
        %p675 = pneg %p138
        %p676 = pneg %p135
        %p677 = scmp.lt.s32.totalorder %s27, 2
        %s678 = scalar_select %p677, %s27, 2
        %s679 = scalar_lea.vmem %s4, %s678
        %p680 = pneg %p164
        %p681 = pneg %p161
        %s682 = sand.u32 %s179, 1
        %s683 = sand.u32 %s179, 1
        %s684 = smul.addr %s683, 128
        %s685 = scalar_lea.vmem [#allocation5], %s684
        %p686 = pneg %p192
        %p687 = pneg %p189
        %p688 = scmp.lt.s32.totalorder %s27, 2
        %s689 = scalar_select %p688, %s27, 2
        %s690 = scalar_lea.vmem %s6, %s689
        %p691 = pneg %p218
        %p692 = pneg %p215
        %p693 = pneg %p244
        %p694 = pneg %p241
        %s695 = sand.u32 %s231, 1
        %s696 = scalar_lea.sflag [#allocation7], %s695
        %s697 = sand.u32 %s231, 1
        %s698 = smul.addr %s697, 8
        %s699 = scalar_lea.vmem [#allocation6], %s698
        %p700 = pneg %p270
        %p701 = pneg %p267
        %p702 = scmp.lt.s32.totalorder %s27, 2
        %s703 = scalar_select %p702, %s27, 2
        %s704 = scalar_lea.vmem %s8, %s703
        %p705 = scmp.lt.s32.totalorder %s28, 2
        %s706 = scalar_select %p705, %s28, 2
        %s707 = smul.addr %s706, 8
        %s708 = scalar_lea.vmem %s0, %s707
        %s709 = smul.u32 16, %s28
        %s710 = smul.u32 16, %s28
        %p711 = scmp.lt.s32.totalorder %s27, 2
        %s712 = scalar_select %p711, %s27, 2
        %s713 = scalar_lea.vmem %s3, %s712
        %p714 = scmp.lt.s32.totalorder %s27, 2
        %s715 = scalar_select %p714, %s27, 2
        %s716 = scalar_lea.vmem %s4, %s715
        %s717 = smul.u32 16, %s28
        %p718 = scmp.lt.s32.totalorder %s27, 2
        %s719 = scalar_select %p718, %s27, 2
        %s720 = scalar_lea.vmem %s6, %s719
        %p721 = scmp.lt.s32.totalorder %s27, 2
        %s722 = scalar_select %p721, %s27, 2
        %s723 = scalar_lea.vmem %s8, %s722
        %p724 = scmp.eq.s32.totalorder %s28, 0
        // Predicated region
        $region163: #{bayesian_linear.1} parent=149 // pred_check
          %p725 = pneg %p724
        $region164: #{bayesian_linear.1} parent=149 // pred_check_branch
          %727 = sbr.rel (%p725) target = $region166
        $region165: #{bayesian_linear.1} parent=149 // pred_region
          %728 = vst [vmem:[#allocation2] sm:$0xff] 0.0
          %729 = vst [vmem:[%s723] sm:$0x1] 0.0
        $region166: #{bayesian_linear.1} parent=149 // pred_fallthru
          _
        %v730 = vld [vmem:[%s636] sm:$0xff]
        %v731 = vld [vmem:[%s636 + $0x8] sm:$0xff]
        %v732 = vld [vmem:[%s636 + $0x10] sm:$0xff]
        %v733 = vld [vmem:[%s636 + $0x18] sm:$0xff]
        %v734 = vld [vmem:[%s636 + $0x20] sm:$0xff]
        %v735 = vld [vmem:[%s636 + $0x28] sm:$0xff]
        %v736 = vld [vmem:[%s636 + $0x30] sm:$0xff]
        %v737 = vld [vmem:[%s636 + $0x38] sm:$0xff]
        %v738 = vld [vmem:[%s636 + $0x40] sm:$0xff]
        %v739 = vld [vmem:[%s636 + $0x48] sm:$0xff]
        %v740 = vld [vmem:[%s636 + $0x50] sm:$0xff]
        %v741 = vld [vmem:[%s636 + $0x58] sm:$0xff]
        %v742 = vld [vmem:[%s636 + $0x60] sm:$0xff]
        %v743 = vld [vmem:[%s636 + $0x68] sm:$0xff]
        %v744 = vld [vmem:[%s636 + $0x70] sm:$0xff]
        %v745 = vld [vmem:[%s636 + $0x78] sm:$0xff]
        %v746 = vld [vmem:[%s643] sm:$0xff]
        %v747 = vld [vmem:[%s643 + $0x8] sm:$0xff]
        %v748 = vld [vmem:[%s643 + $0x10] sm:$0xff]
        %v749 = vld [vmem:[%s643 + $0x18] sm:$0xff]
        %v750 = vld [vmem:[%s643 + $0x20] sm:$0xff]
        %v751 = vld [vmem:[%s643 + $0x28] sm:$0xff]
        %v752 = vld [vmem:[%s643 + $0x30] sm:$0xff]
        %v753 = vld [vmem:[%s643 + $0x38] sm:$0xff]
        %v754 = vld [vmem:[%s643 + $0x40] sm:$0xff]
        %v755 = vld [vmem:[%s643 + $0x48] sm:$0xff]
        %v756 = vld [vmem:[%s643 + $0x50] sm:$0xff]
        %v757 = vld [vmem:[%s643 + $0x58] sm:$0xff]
        %v758 = vld [vmem:[%s643 + $0x60] sm:$0xff]
        %v759 = vld [vmem:[%s643 + $0x68] sm:$0xff]
        %v760 = vld [vmem:[%s643 + $0x70] sm:$0xff]
        %v761 = vld [vmem:[%s643 + $0x78] sm:$0xff]
        %v762 = vmax.f32 %v746, 0.0
        %v763 = vmax.f32 %v747, 0.0
        %v764 = vmax.f32 %v748, 0.0
        %v765 = vmax.f32 %v749, 0.0
        %v766 = vmax.f32 %v750, 0.0
        %v767 = vmax.f32 %v751, 0.0
        %v768 = vmax.f32 %v752, 0.0
        %v769 = vmax.f32 %v753, 0.0
        %v770 = vmax.f32 %v754, 0.0
        %v771 = vmax.f32 %v755, 0.0
        %v772 = vmax.f32 %v756, 0.0
        %v773 = vmax.f32 %v757, 0.0
        %v774 = vmax.f32 %v758, 0.0
        %v775 = vmax.f32 %v759, 0.0
        %v776 = vmax.f32 %v760, 0.0
        %v777 = vmax.f32 %v761, 0.0
        %v778 = vand.u32 2147483647, %v746
        %v779 = vand.u32 2147483647, %v747
        %v780 = vand.u32 2147483647, %v748
        %v781 = vand.u32 2147483647, %v749
        %v782 = vand.u32 2147483647, %v750
        %v783 = vand.u32 2147483647, %v751
        %v784 = vand.u32 2147483647, %v752
        %v785 = vand.u32 2147483647, %v753
        %v786 = vand.u32 2147483647, %v754
        %v787 = vand.u32 2147483647, %v755
        %v788 = vand.u32 2147483647, %v756
        %v789 = vand.u32 2147483647, %v757
        %v790 = vand.u32 2147483647, %v758
        %v791 = vand.u32 2147483647, %v759
        %v792 = vand.u32 2147483647, %v760
        %v793 = vand.u32 2147483647, %v761
        %v794 = vsub.f32 0.0, %v778
        %v795 = vsub.f32 0.0, %v779
        %v796 = vsub.f32 0.0, %v780
        %v797 = vsub.f32 0.0, %v781
        %v798 = vsub.f32 0.0, %v782
        %v799 = vsub.f32 0.0, %v783
        %v800 = vsub.f32 0.0, %v784
        %v801 = vsub.f32 0.0, %v785
        %v802 = vsub.f32 0.0, %v786
        %v803 = vsub.f32 0.0, %v787
        %v804 = vsub.f32 0.0, %v788
        %v805 = vsub.f32 0.0, %v789
        %v806 = vsub.f32 0.0, %v790
        %v807 = vsub.f32 0.0, %v791
        %v808 = vsub.f32 0.0, %v792
        %v809 = vsub.f32 0.0, %v793
        %v810 = vmul.f32 %v794, 1.442695
        %v811 = vpow.pop %v810
        %v812 = vmul.f32 %v795, 1.442695
        %v813 = vpow.pop %v812
        %v814 = vmul.f32 %v796, 1.442695
        %v815 = vpow.pop %v814
        %v816 = vmul.f32 %v797, 1.442695
        %v817 = vpow.pop %v816
        %v818 = vmul.f32 %v798, 1.442695
        %v819 = vpow.pop %v818
        %v820 = vmul.f32 %v799, 1.442695
        %v821 = vpow.pop %v820
        %v822 = vmul.f32 %v800, 1.442695
        %v823 = vpow.pop %v822
        %v824 = vmul.f32 %v801, 1.442695
        %v825 = vpow.pop %v824
        %v826 = vmul.f32 %v802, 1.442695
        %v827 = vpow.pop %v826
        %v828 = vmul.f32 %v803, 1.442695
        %v829 = vpow.pop %v828
        %v830 = vmul.f32 %v804, 1.442695
        %v831 = vpow.pop %v830
        %v832 = vmul.f32 %v805, 1.442695
        %v833 = vpow.pop %v832
        %v834 = vmul.f32 %v806, 1.442695
        %v835 = vpow.pop %v834
        %v836 = vmul.f32 %v807, 1.442695
        %v837 = vpow.pop %v836
        %v838 = vmul.f32 %v808, 1.442695
        %v839 = vpow.pop %v838
        %v840 = vmul.f32 %v809, 1.442695
        %v841 = vpow.pop %v840
        %v842 = vadd.f32 %v811, 1.0
        %v843 = vlog2.pop %v842
        %v844 = vmul.f32 %v843, 0.6931472
        %v845 = vmul.f32 -0.5, %v811
        %v846 = vadd.f32 %v845, 1.0
        %v847 = vmul.f32 %v846, %v811
        %v848 = vand.u32 2147483647, %v811
        %vm849 = vcmp.lt.f32.partialorder %v848, 0.0004427343
        %v850 = vsel %vm849, %v847, %v844
        %v851 = vadd.f32 %v813, 1.0
        %v852 = vlog2.pop %v851
        %v853 = vmul.f32 %v852, 0.6931472
        %v854 = vmul.f32 -0.5, %v813
        %v855 = vadd.f32 %v854, 1.0
        %v856 = vmul.f32 %v855, %v813
        %v857 = vand.u32 2147483647, %v813
        %vm858 = vcmp.lt.f32.partialorder %v857, 0.0004427343
        %v859 = vsel %vm858, %v856, %v853
        %v860 = vadd.f32 %v815, 1.0
        %v861 = vlog2.pop %v860
        %v862 = vmul.f32 %v861, 0.6931472
        %v863 = vmul.f32 -0.5, %v815
        %v864 = vadd.f32 %v863, 1.0
        %v865 = vmul.f32 %v864, %v815
        %v866 = vand.u32 2147483647, %v815
        %vm867 = vcmp.lt.f32.partialorder %v866, 0.0004427343
        %v868 = vsel %vm867, %v865, %v862
        %v869 = vadd.f32 %v817, 1.0
        %v870 = vlog2.pop %v869
        %v871 = vmul.f32 %v870, 0.6931472
        %v872 = vmul.f32 -0.5, %v817
        %v873 = vadd.f32 %v872, 1.0
        %v874 = vmul.f32 %v873, %v817
        %v875 = vand.u32 2147483647, %v817
        %vm876 = vcmp.lt.f32.partialorder %v875, 0.0004427343
        %v877 = vsel %vm876, %v874, %v871
        %v878 = vadd.f32 %v819, 1.0
        %v879 = vlog2.pop %v878
        %v880 = vmul.f32 %v879, 0.6931472
        %v881 = vmul.f32 -0.5, %v819
        %v882 = vadd.f32 %v881, 1.0
        %v883 = vmul.f32 %v882, %v819
        %v884 = vand.u32 2147483647, %v819
        %vm885 = vcmp.lt.f32.partialorder %v884, 0.0004427343
        %v886 = vsel %vm885, %v883, %v880
        %v887 = vadd.f32 %v821, 1.0
        %v888 = vlog2.pop %v887
        %v889 = vmul.f32 %v888, 0.6931472
        %v890 = vmul.f32 -0.5, %v821
        %v891 = vadd.f32 %v890, 1.0
        %v892 = vmul.f32 %v891, %v821
        %v893 = vand.u32 2147483647, %v821
        %vm894 = vcmp.lt.f32.partialorder %v893, 0.0004427343
        %v895 = vsel %vm894, %v892, %v889
        %v896 = vadd.f32 %v823, 1.0
        %v897 = vlog2.pop %v896
        %v898 = vmul.f32 %v897, 0.6931472
        %v899 = vmul.f32 -0.5, %v823
        %v900 = vadd.f32 %v899, 1.0
        %v901 = vmul.f32 %v900, %v823
        %v902 = vand.u32 2147483647, %v823
        %vm903 = vcmp.lt.f32.partialorder %v902, 0.0004427343
        %v904 = vsel %vm903, %v901, %v898
        %v905 = vadd.f32 %v825, 1.0
        %v906 = vlog2.pop %v905
        %v907 = vmul.f32 %v906, 0.6931472
        %v908 = vmul.f32 -0.5, %v825
        %v909 = vadd.f32 %v908, 1.0
        %v910 = vmul.f32 %v909, %v825
        %v911 = vand.u32 2147483647, %v825
        %vm912 = vcmp.lt.f32.partialorder %v911, 0.0004427343
        %v913 = vsel %vm912, %v910, %v907
        %v914 = vadd.f32 %v827, 1.0
        %v915 = vlog2.pop %v914
        %v916 = vmul.f32 %v915, 0.6931472
        %v917 = vmul.f32 -0.5, %v827
        %v918 = vadd.f32 %v917, 1.0
        %v919 = vmul.f32 %v918, %v827
        %v920 = vand.u32 2147483647, %v827
        %vm921 = vcmp.lt.f32.partialorder %v920, 0.0004427343
        %v922 = vsel %vm921, %v919, %v916
        %v923 = vadd.f32 %v829, 1.0
        %v924 = vlog2.pop %v923
        %v925 = vmul.f32 %v924, 0.6931472
        %v926 = vmul.f32 -0.5, %v829
        %v927 = vadd.f32 %v926, 1.0
        %v928 = vmul.f32 %v927, %v829
        %v929 = vand.u32 2147483647, %v829
        %vm930 = vcmp.lt.f32.partialorder %v929, 0.0004427343
        %v931 = vsel %vm930, %v928, %v925
        %v932 = vadd.f32 %v831, 1.0
        %v933 = vlog2.pop %v932
        %v934 = vmul.f32 %v933, 0.6931472
        %v935 = vmul.f32 -0.5, %v831
        %v936 = vadd.f32 %v935, 1.0
        %v937 = vmul.f32 %v936, %v831
        %v938 = vand.u32 2147483647, %v831
        %vm939 = vcmp.lt.f32.partialorder %v938, 0.0004427343
        %v940 = vsel %vm939, %v937, %v934
        %v941 = vadd.f32 %v833, 1.0
        %v942 = vlog2.pop %v941
        %v943 = vmul.f32 %v942, 0.6931472
        %v944 = vmul.f32 -0.5, %v833
        %v945 = vadd.f32 %v944, 1.0
        %v946 = vmul.f32 %v945, %v833
        %v947 = vand.u32 2147483647, %v833
        %vm948 = vcmp.lt.f32.partialorder %v947, 0.0004427343
        %v949 = vsel %vm948, %v946, %v943
        %v950 = vadd.f32 %v835, 1.0
        %v951 = vlog2.pop %v950
        %v952 = vmul.f32 %v951, 0.6931472
        %v953 = vmul.f32 -0.5, %v835
        %v954 = vadd.f32 %v953, 1.0
        %v955 = vmul.f32 %v954, %v835
        %v956 = vand.u32 2147483647, %v835
        %vm957 = vcmp.lt.f32.partialorder %v956, 0.0004427343
        %v958 = vsel %vm957, %v955, %v952
        %v959 = vadd.f32 %v837, 1.0
        %v960 = vlog2.pop %v959
        %v961 = vmul.f32 %v960, 0.6931472
        %v962 = vmul.f32 -0.5, %v837
        %v963 = vadd.f32 %v962, 1.0
        %v964 = vmul.f32 %v963, %v837
        %v965 = vand.u32 2147483647, %v837
        %vm966 = vcmp.lt.f32.partialorder %v965, 0.0004427343
        %v967 = vsel %vm966, %v964, %v961
        %v968 = vadd.f32 %v839, 1.0
        %v969 = vlog2.pop %v968
        %v970 = vmul.f32 %v969, 0.6931472
        %v971 = vmul.f32 -0.5, %v839
        %v972 = vadd.f32 %v971, 1.0
        %v973 = vmul.f32 %v972, %v839
        %v974 = vand.u32 2147483647, %v839
        %vm975 = vcmp.lt.f32.partialorder %v974, 0.0004427343
        %v976 = vsel %vm975, %v973, %v970
        %v977 = vadd.f32 %v841, 1.0
        %v978 = vlog2.pop %v977
        %v979 = vmul.f32 %v978, 0.6931472
        %v980 = vmul.f32 -0.5, %v841
        %v981 = vadd.f32 %v980, 1.0
        %v982 = vmul.f32 %v981, %v841
        %v983 = vand.u32 2147483647, %v841
        %vm984 = vcmp.lt.f32.partialorder %v983, 0.0004427343
        %v985 = vsel %vm984, %v982, %v979
        %v986 = vadd.f32 %v762, %v850
        %v987 = vadd.f32 %v763, %v859
        %v988 = vadd.f32 %v764, %v868
        %v989 = vadd.f32 %v765, %v877
        %v990 = vadd.f32 %v766, %v886
        %v991 = vadd.f32 %v767, %v895
        %v992 = vadd.f32 %v768, %v904
        %v993 = vadd.f32 %v769, %v913
        %v994 = vadd.f32 %v770, %v922
        %v995 = vadd.f32 %v771, %v931
        %v996 = vadd.f32 %v772, %v940
        %v997 = vadd.f32 %v773, %v949
        %v998 = vadd.f32 %v774, %v958
        %v999 = vadd.f32 %v775, %v967
        %v1000 = vadd.f32 %v776, %v976
        %v1001 = vadd.f32 %v777, %v985
        %v1002 = vmul.f32 %v986, -10.0
        %v1003 = vmul.f32 %v987, -10.0
        %v1004 = vmul.f32 %v988, -10.0
        %v1005 = vmul.f32 %v989, -10.0
        %v1006 = vmul.f32 %v990, -10.0
        %v1007 = vmul.f32 %v991, -10.0
        %v1008 = vmul.f32 %v992, -10.0
        %v1009 = vmul.f32 %v993, -10.0
        %v1010 = vmul.f32 %v994, -10.0
        %v1011 = vmul.f32 %v995, -10.0
        %v1012 = vmul.f32 %v996, -10.0
        %v1013 = vmul.f32 %v997, -10.0
        %v1014 = vmul.f32 %v998, -10.0
        %v1015 = vmul.f32 %v999, -10.0
        %v1016 = vmul.f32 %v1000, -10.0
        %v1017 = vmul.f32 %v1001, -10.0
        %v1018 = vmul.f32 %v1002, 1.442695
        %v1019 = vpow.pop %v1018
        %v1020 = vmul.f32 %v1003, 1.442695
        %v1021 = vpow.pop %v1020
        %v1022 = vmul.f32 %v1004, 1.442695
        %v1023 = vpow.pop %v1022
        %v1024 = vmul.f32 %v1005, 1.442695
        %v1025 = vpow.pop %v1024
        %v1026 = vmul.f32 %v1006, 1.442695
        %v1027 = vpow.pop %v1026
        %v1028 = vmul.f32 %v1007, 1.442695
        %v1029 = vpow.pop %v1028
        %v1030 = vmul.f32 %v1008, 1.442695
        %v1031 = vpow.pop %v1030
        %v1032 = vmul.f32 %v1009, 1.442695
        %v1033 = vpow.pop %v1032
        %v1034 = vmul.f32 %v1010, 1.442695
        %v1035 = vpow.pop %v1034
        %v1036 = vmul.f32 %v1011, 1.442695
        %v1037 = vpow.pop %v1036
        %v1038 = vmul.f32 %v1012, 1.442695
        %v1039 = vpow.pop %v1038
        %v1040 = vmul.f32 %v1013, 1.442695
        %v1041 = vpow.pop %v1040
        %v1042 = vmul.f32 %v1014, 1.442695
        %v1043 = vpow.pop %v1042
        %v1044 = vmul.f32 %v1015, 1.442695
        %v1045 = vpow.pop %v1044
        %v1046 = vmul.f32 %v1016, 1.442695
        %v1047 = vpow.pop %v1046
        %v1048 = vmul.f32 %v1017, 1.442695
        %v1049 = vpow.pop %v1048
        %v1050 = vadd.f32 %v1019, 1.0
        %v1051 = vlog2.pop %v1050
        %v1052 = vmul.f32 %v1051, 0.6931472
        %v1053 = vmul.f32 -0.5, %v1019
        %v1054 = vadd.f32 %v1053, 1.0
        %v1055 = vmul.f32 %v1054, %v1019
        %v1056 = vand.u32 2147483647, %v1019
        %vm1057 = vcmp.lt.f32.partialorder %v1056, 0.0004427343
        %v1058 = vsel %vm1057, %v1055, %v1052
        %v1059 = vadd.f32 %v1021, 1.0
        %v1060 = vlog2.pop %v1059
        %v1061 = vmul.f32 %v1060, 0.6931472
        %v1062 = vmul.f32 -0.5, %v1021
        %v1063 = vadd.f32 %v1062, 1.0
        %v1064 = vmul.f32 %v1063, %v1021
        %v1065 = vand.u32 2147483647, %v1021
        %vm1066 = vcmp.lt.f32.partialorder %v1065, 0.0004427343
        %v1067 = vsel %vm1066, %v1064, %v1061
        %v1068 = vadd.f32 %v1023, 1.0
        %v1069 = vlog2.pop %v1068
        %v1070 = vmul.f32 %v1069, 0.6931472
        %v1071 = vmul.f32 -0.5, %v1023
        %v1072 = vadd.f32 %v1071, 1.0
        %v1073 = vmul.f32 %v1072, %v1023
        %v1074 = vand.u32 2147483647, %v1023
        %vm1075 = vcmp.lt.f32.partialorder %v1074, 0.0004427343
        %v1076 = vsel %vm1075, %v1073, %v1070
        %v1077 = vadd.f32 %v1025, 1.0
        %v1078 = vlog2.pop %v1077
        %v1079 = vmul.f32 %v1078, 0.6931472
        %v1080 = vmul.f32 -0.5, %v1025
        %v1081 = vadd.f32 %v1080, 1.0
        %v1082 = vmul.f32 %v1081, %v1025
        %v1083 = vand.u32 2147483647, %v1025
        %vm1084 = vcmp.lt.f32.partialorder %v1083, 0.0004427343
        %v1085 = vsel %vm1084, %v1082, %v1079
        %v1086 = vadd.f32 %v1027, 1.0
        %v1087 = vlog2.pop %v1086
        %v1088 = vmul.f32 %v1087, 0.6931472
        %v1089 = vmul.f32 -0.5, %v1027
        %v1090 = vadd.f32 %v1089, 1.0
        %v1091 = vmul.f32 %v1090, %v1027
        %v1092 = vand.u32 2147483647, %v1027
        %vm1093 = vcmp.lt.f32.partialorder %v1092, 0.0004427343
        %v1094 = vsel %vm1093, %v1091, %v1088
        %v1095 = vadd.f32 %v1029, 1.0
        %v1096 = vlog2.pop %v1095
        %v1097 = vmul.f32 %v1096, 0.6931472
        %v1098 = vmul.f32 -0.5, %v1029
        %v1099 = vadd.f32 %v1098, 1.0
        %v1100 = vmul.f32 %v1099, %v1029
        %v1101 = vand.u32 2147483647, %v1029
        %vm1102 = vcmp.lt.f32.partialorder %v1101, 0.0004427343
        %v1103 = vsel %vm1102, %v1100, %v1097
        %v1104 = vadd.f32 %v1031, 1.0
        %v1105 = vlog2.pop %v1104
        %v1106 = vmul.f32 %v1105, 0.6931472
        %v1107 = vmul.f32 -0.5, %v1031
        %v1108 = vadd.f32 %v1107, 1.0
        %v1109 = vmul.f32 %v1108, %v1031
        %v1110 = vand.u32 2147483647, %v1031
        %vm1111 = vcmp.lt.f32.partialorder %v1110, 0.0004427343
        %v1112 = vsel %vm1111, %v1109, %v1106
        %v1113 = vadd.f32 %v1033, 1.0
        %v1114 = vlog2.pop %v1113
        %v1115 = vmul.f32 %v1114, 0.6931472
        %v1116 = vmul.f32 -0.5, %v1033
        %v1117 = vadd.f32 %v1116, 1.0
        %v1118 = vmul.f32 %v1117, %v1033
        %v1119 = vand.u32 2147483647, %v1033
        %vm1120 = vcmp.lt.f32.partialorder %v1119, 0.0004427343
        %v1121 = vsel %vm1120, %v1118, %v1115
        %v1122 = vadd.f32 %v1035, 1.0
        %v1123 = vlog2.pop %v1122
        %v1124 = vmul.f32 %v1123, 0.6931472
        %v1125 = vmul.f32 -0.5, %v1035
        %v1126 = vadd.f32 %v1125, 1.0
        %v1127 = vmul.f32 %v1126, %v1035
        %v1128 = vand.u32 2147483647, %v1035
        %vm1129 = vcmp.lt.f32.partialorder %v1128, 0.0004427343
        %v1130 = vsel %vm1129, %v1127, %v1124
        %v1131 = vadd.f32 %v1037, 1.0
        %v1132 = vlog2.pop %v1131
        %v1133 = vmul.f32 %v1132, 0.6931472
        %v1134 = vmul.f32 -0.5, %v1037
        %v1135 = vadd.f32 %v1134, 1.0
        %v1136 = vmul.f32 %v1135, %v1037
        %v1137 = vand.u32 2147483647, %v1037
        %vm1138 = vcmp.lt.f32.partialorder %v1137, 0.0004427343
        %v1139 = vsel %vm1138, %v1136, %v1133
        %v1140 = vadd.f32 %v1039, 1.0
        %v1141 = vlog2.pop %v1140
        %v1142 = vmul.f32 %v1141, 0.6931472
        %v1143 = vmul.f32 -0.5, %v1039
        %v1144 = vadd.f32 %v1143, 1.0
        %v1145 = vmul.f32 %v1144, %v1039
        %v1146 = vand.u32 2147483647, %v1039
        %vm1147 = vcmp.lt.f32.partialorder %v1146, 0.0004427343
        %v1148 = vsel %vm1147, %v1145, %v1142
        %v1149 = vadd.f32 %v1041, 1.0
        %v1150 = vlog2.pop %v1149
        %v1151 = vmul.f32 %v1150, 0.6931472
        %v1152 = vmul.f32 -0.5, %v1041
        %v1153 = vadd.f32 %v1152, 1.0
        %v1154 = vmul.f32 %v1153, %v1041
        %v1155 = vand.u32 2147483647, %v1041
        %vm1156 = vcmp.lt.f32.partialorder %v1155, 0.0004427343
        %v1157 = vsel %vm1156, %v1154, %v1151
        %v1158 = vadd.f32 %v1043, 1.0
        %v1159 = vlog2.pop %v1158
        %v1160 = vmul.f32 %v1159, 0.6931472
        %v1161 = vmul.f32 -0.5, %v1043
        %v1162 = vadd.f32 %v1161, 1.0
        %v1163 = vmul.f32 %v1162, %v1043
        %v1164 = vand.u32 2147483647, %v1043
        %vm1165 = vcmp.lt.f32.partialorder %v1164, 0.0004427343
        %v1166 = vsel %vm1165, %v1163, %v1160
        %v1167 = vadd.f32 %v1045, 1.0
        %v1168 = vlog2.pop %v1167
        %v1169 = vmul.f32 %v1168, 0.6931472
        %v1170 = vmul.f32 -0.5, %v1045
        %v1171 = vadd.f32 %v1170, 1.0
        %v1172 = vmul.f32 %v1171, %v1045
        %v1173 = vand.u32 2147483647, %v1045
        %vm1174 = vcmp.lt.f32.partialorder %v1173, 0.0004427343
        %v1175 = vsel %vm1174, %v1172, %v1169
        %v1176 = vadd.f32 %v1047, 1.0
        %v1177 = vlog2.pop %v1176
        %v1178 = vmul.f32 %v1177, 0.6931472
        %v1179 = vmul.f32 -0.5, %v1047
        %v1180 = vadd.f32 %v1179, 1.0
        %v1181 = vmul.f32 %v1180, %v1047
        %v1182 = vand.u32 2147483647, %v1047
        %vm1183 = vcmp.lt.f32.partialorder %v1182, 0.0004427343
        %v1184 = vsel %vm1183, %v1181, %v1178
        %v1185 = vadd.f32 %v1049, 1.0
        %v1186 = vlog2.pop %v1185
        %v1187 = vmul.f32 %v1186, 0.6931472
        %v1188 = vmul.f32 -0.5, %v1049
        %v1189 = vadd.f32 %v1188, 1.0
        %v1190 = vmul.f32 %v1189, %v1049
        %v1191 = vand.u32 2147483647, %v1049
        %vm1192 = vcmp.lt.f32.partialorder %v1191, 0.0004427343
        %v1193 = vsel %vm1192, %v1190, %v1187
        %v1194 = vrcp.pop 10.0
        %v1195 = vmul.f32 %v1058, %v1194
        %v1196 = vmul.f32 %v1067, %v1194
        %v1197 = vmul.f32 %v1076, %v1194
        %v1198 = vmul.f32 %v1085, %v1194
        %v1199 = vmul.f32 %v1094, %v1194
        %v1200 = vmul.f32 %v1103, %v1194
        %v1201 = vmul.f32 %v1112, %v1194
        %v1202 = vmul.f32 %v1121, %v1194
        %v1203 = vmul.f32 %v1130, %v1194
        %v1204 = vmul.f32 %v1139, %v1194
        %v1205 = vmul.f32 %v1148, %v1194
        %v1206 = vmul.f32 %v1157, %v1194
        %v1207 = vmul.f32 %v1166, %v1194
        %v1208 = vmul.f32 %v1175, %v1194
        %v1209 = vmul.f32 %v1184, %v1194
        %v1210 = vmul.f32 %v1193, %v1194
        %v1211 = vadd.f32 %v986, %v1195
        %v1212 = vadd.f32 %v987, %v1196
        %v1213 = vadd.f32 %v988, %v1197
        %v1214 = vadd.f32 %v989, %v1198
        %v1215 = vadd.f32 %v990, %v1199
        %v1216 = vadd.f32 %v991, %v1200
        %v1217 = vadd.f32 %v992, %v1201
        %v1218 = vadd.f32 %v993, %v1202
        %v1219 = vadd.f32 %v994, %v1203
        %v1220 = vadd.f32 %v995, %v1204
        %v1221 = vadd.f32 %v996, %v1205
        %v1222 = vadd.f32 %v997, %v1206
        %v1223 = vadd.f32 %v998, %v1207
        %v1224 = vadd.f32 %v999, %v1208
        %v1225 = vadd.f32 %v1000, %v1209
        %v1226 = vadd.f32 %v1001, %v1210
        %v1227 = vld [vmem:[%s650] sm:$0xff]
        %v1228 = vld [vmem:[%s650 + $0x8] sm:$0xff]
        %v1229 = vld [vmem:[%s650 + $0x10] sm:$0xff]
        %v1230 = vld [vmem:[%s650 + $0x18] sm:$0xff]
        %v1231 = vld [vmem:[%s650 + $0x20] sm:$0xff]
        %v1232 = vld [vmem:[%s650 + $0x28] sm:$0xff]
        %v1233 = vld [vmem:[%s650 + $0x30] sm:$0xff]
        %v1234 = vld [vmem:[%s650 + $0x38] sm:$0xff]
        %v1235 = vld [vmem:[%s650 + $0x40] sm:$0xff]
        %v1236 = vld [vmem:[%s650 + $0x48] sm:$0xff]
        %v1237 = vld [vmem:[%s650 + $0x50] sm:$0xff]
        %v1238 = vld [vmem:[%s650 + $0x58] sm:$0xff]
        %v1239 = vld [vmem:[%s650 + $0x60] sm:$0xff]
        %v1240 = vld [vmem:[%s650 + $0x68] sm:$0xff]
        %v1241 = vld [vmem:[%s650 + $0x70] sm:$0xff]
        %v1242 = vld [vmem:[%s650 + $0x78] sm:$0xff]
        %v1243 = vmul.f32 %v1211, %v1227
        %v1244 = vmul.f32 %v1212, %v1228
        %v1245 = vmul.f32 %v1213, %v1229
        %v1246 = vmul.f32 %v1214, %v1230
        %v1247 = vmul.f32 %v1215, %v1231
        %v1248 = vmul.f32 %v1216, %v1232
        %v1249 = vmul.f32 %v1217, %v1233
        %v1250 = vmul.f32 %v1218, %v1234
        %v1251 = vmul.f32 %v1219, %v1235
        %v1252 = vmul.f32 %v1220, %v1236
        %v1253 = vmul.f32 %v1221, %v1237
        %v1254 = vmul.f32 %v1222, %v1238
        %v1255 = vmul.f32 %v1223, %v1239
        %v1256 = vmul.f32 %v1224, %v1240
        %v1257 = vmul.f32 %v1225, %v1241
        %v1258 = vmul.f32 %v1226, %v1242
        %v1259 = vadd.f32 %v730, %v1243
        %v1260 = vadd.f32 %v731, %v1244
        %v1261 = vadd.f32 %v732, %v1245
        %v1262 = vadd.f32 %v733, %v1246
        %v1263 = vadd.f32 %v734, %v1247
        %v1264 = vadd.f32 %v735, %v1248
        %v1265 = vadd.f32 %v736, %v1249
        %v1266 = vadd.f32 %v737, %v1250
        %v1267 = vadd.f32 %v738, %v1251
        %v1268 = vadd.f32 %v739, %v1252
        %v1269 = vadd.f32 %v740, %v1253
        %v1270 = vadd.f32 %v741, %v1254
        %v1271 = vadd.f32 %v742, %v1255
        %v1272 = vadd.f32 %v743, %v1256
        %v1273 = vadd.f32 %v744, %v1257
        %v1274 = vadd.f32 %v745, %v1258
        %v1275 = vld [vmem:[#allocation2] sm:$0xff]
        %v1276 = vld [vmem:[%s708] sm:$0xff]
        %1277 = vmatprep.subr.mxu0 0.0
        %1278 = vmatpush1.msra.mxu0 %v1259
        %1279 = vmatprep.subr.mxu0 0.0
        %1280 = vmatpush1.msra.mxu0 %v1260
        %1281 = vmatprep.subr.mxu0 0.0
        %1282 = vmatpush1.msra.mxu0 %v1261
        %1283 = vmatprep.subr.mxu0 0.0
        %1284 = vmatpush1.msra.mxu0 %v1262
        %1285 = vmatprep.subr.mxu0 0.0
        %1286 = vmatpush1.msra.mxu0 %v1263
        %1287 = vmatprep.subr.mxu0 0.0
        %1288 = vmatpush1.msra.mxu0 %v1264
        %1289 = vmatprep.subr.mxu0 0.0
        %1290 = vmatpush1.msra.mxu0 %v1265
        %1291 = vmatprep.subr.mxu0 0.0
        %1292 = vmatpush1.msra.mxu0 %v1266
        %1293 = vmatprep.subr.mxu0 0.0
        %1294 = vmatpush1.msra.mxu0 %v1267
        %1295 = vmatprep.subr.mxu0 0.0
        %1296 = vmatpush1.msra.mxu0 %v1268
        %1297 = vmatprep.subr.mxu0 0.0
        %1298 = vmatpush1.msra.mxu0 %v1269
        %1299 = vmatprep.subr.mxu0 0.0
        %1300 = vmatpush1.msra.mxu0 %v1270
        %1301 = vmatprep.subr.mxu0 0.0
        %1302 = vmatpush1.msra.mxu0 %v1271
        %1303 = vmatprep.subr.mxu0 0.0
        %1304 = vmatpush1.msra.mxu0 %v1272
        %1305 = vmatprep.subr.mxu0 0.0
        %1306 = vmatpush1.msra.mxu0 %v1273
        %1307 = vmatprep.subr.mxu0 0.0
        %1308 = vmatpush1.msra.mxu0 %v1274
        %1309 = vmatprep.subr.mxu0 0.0
        %1310 = vmatpush1.msra.mxu0 0.0
        %1311 = vmatprep.subr.mxu0 0.0
        %1312 = vmatpush1.msra.mxu0 0.0
        %1313 = vmatprep.subr.mxu0 0.0
        %1314 = vmatpush1.msra.mxu0 0.0
        %1315 = vmatprep.subr.mxu0 0.0
        %1316 = vmatpush1.msra.mxu0 0.0
        %1317 = vmatprep.subr.mxu0 0.0
        %1318 = vmatpush1.msra.mxu0 0.0
        %1319 = vmatprep.subr.mxu0 0.0
        %1320 = vmatpush1.msra.mxu0 0.0
        %1321 = vmatprep.subr.mxu0 0.0
        %1322 = vmatpush1.msra.mxu0 0.0
        %1323 = vmatprep.subr.mxu0 0.0
        %1324 = vmatpush1.msra.mxu0 0.0
        %1325 = vmatprep.subr.mxu0 0.0
        %1326 = vmatpush1.msra.mxu0 0.0
        %1327 = vmatprep.subr.mxu0 0.0
        %1328 = vmatpush1.msra.mxu0 0.0
        %1329 = vmatprep.subr.mxu0 0.0
        %1330 = vmatpush1.msra.mxu0 0.0
        %1331 = vmatprep.subr.mxu0 0.0
        %1332 = vmatpush1.msra.mxu0 0.0
        %1333 = vmatprep.subr.mxu0 0.0
        %1334 = vmatpush1.msra.mxu0 0.0
        %1335 = vmatprep.subr.mxu0 0.0
        %1336 = vmatpush1.msra.mxu0 0.0
        %1337 = vmatprep.subr.mxu0 0.0
        %1338 = vmatpush1.msra.mxu0 0.0
        %1339 = vmatprep.subr.mxu0 0.0
        %1340 = vmatpush1.msra.mxu0 0.0
        %1341 = vmatprep.mubr.f32.mxu0 0.0
        %1342 = vmatmul.mubr.f32.gmra.mrb[0].mxu0 %v1276
        %v1343 = vpop.f32.mrb[0].mxu0
        %v1344 = vadd.f32 0.0, %v1343
        %v1345 = vpop.f32.mrb[0].mxu0
        %1346 = vdwg.mxu0
        %v1347 = vadd.f32 %v1275, %v1344
        %1348 = vst [vmem:[#allocation2] sm:$0xff] %v1347
        %v1349 = vlaneseq
        %v1350 = vshrl.u32 %v1349, 7
        %v1351 = vadd.s32 %v1350, 8
        %v1352 = vadd.s32 %v1350, 16
        %v1353 = vadd.s32 %v1350, 24
        %v1354 = vadd.s32 %v1350, 32
        %v1355 = vadd.s32 %v1350, 40
        %v1356 = vadd.s32 %v1350, 48
        %v1357 = vadd.s32 %v1350, 56
        %v1358 = vadd.s32 %v1350, 64
        %v1359 = vadd.s32 %v1350, 72
        %v1360 = vadd.s32 %v1350, 80
        %v1361 = vadd.s32 %v1350, 88
        %v1362 = vadd.s32 %v1350, 96
        %v1363 = vadd.s32 %v1350, 104
        %v1364 = vadd.s32 %v1350, 112
        %v1365 = vadd.s32 %v1350, 120
        %s1366 = smul.u32 %s28, 128
        %v1367 = vstv %s1366
        %v1368 = vadd.s32 %v1350, %v1367
        %v1369 = vadd.s32 %v1351, %v1367
        %v1370 = vadd.s32 %v1352, %v1367
        %v1371 = vadd.s32 %v1353, %v1367
        %v1372 = vadd.s32 %v1354, %v1367
        %v1373 = vadd.s32 %v1355, %v1367
        %v1374 = vadd.s32 %v1356, %v1367
        %v1375 = vadd.s32 %v1357, %v1367
        %v1376 = vadd.s32 %v1358, %v1367
        %v1377 = vadd.s32 %v1359, %v1367
        %v1378 = vadd.s32 %v1360, %v1367
        %v1379 = vadd.s32 %v1361, %v1367
        %v1380 = vadd.s32 %v1362, %v1367
        %v1381 = vadd.s32 %v1363, %v1367
        %v1382 = vadd.s32 %v1364, %v1367
        %v1383 = vadd.s32 %v1365, %v1367
        %vm1384 = vcmp.lt.s32.totalorder %v1368, 300
        %vm1385 = vcmp.lt.s32.totalorder %v1369, 300
        %vm1386 = vcmp.lt.s32.totalorder %v1370, 300
        %vm1387 = vcmp.lt.s32.totalorder %v1371, 300
        %vm1388 = vcmp.lt.s32.totalorder %v1372, 300
        %vm1389 = vcmp.lt.s32.totalorder %v1373, 300
        %vm1390 = vcmp.lt.s32.totalorder %v1374, 300
        %vm1391 = vcmp.lt.s32.totalorder %v1375, 300
        %vm1392 = vcmp.lt.s32.totalorder %v1376, 300
        %vm1393 = vcmp.lt.s32.totalorder %v1377, 300
        %vm1394 = vcmp.lt.s32.totalorder %v1378, 300
        %vm1395 = vcmp.lt.s32.totalorder %v1379, 300
        %vm1396 = vcmp.lt.s32.totalorder %v1380, 300
        %vm1397 = vcmp.lt.s32.totalorder %v1381, 300
        %vm1398 = vcmp.lt.s32.totalorder %v1382, 300
        %vm1399 = vcmp.lt.s32.totalorder %v1383, 300
        %v1400 = vlog2.pop %v986
        %v1401 = vmul.f32 %v1400, 0.6931472
        %v1402 = vlog2.pop %v987
        %v1403 = vmul.f32 %v1402, 0.6931472
        %v1404 = vlog2.pop %v988
        %v1405 = vmul.f32 %v1404, 0.6931472
        %v1406 = vlog2.pop %v989
        %v1407 = vmul.f32 %v1406, 0.6931472
        %v1408 = vlog2.pop %v990
        %v1409 = vmul.f32 %v1408, 0.6931472
        %v1410 = vlog2.pop %v991
        %v1411 = vmul.f32 %v1410, 0.6931472
        %v1412 = vlog2.pop %v992
        %v1413 = vmul.f32 %v1412, 0.6931472
        %v1414 = vlog2.pop %v993
        %v1415 = vmul.f32 %v1414, 0.6931472
        %v1416 = vlog2.pop %v994
        %v1417 = vmul.f32 %v1416, 0.6931472
        %v1418 = vlog2.pop %v995
        %v1419 = vmul.f32 %v1418, 0.6931472
        %v1420 = vlog2.pop %v996
        %v1421 = vmul.f32 %v1420, 0.6931472
        %v1422 = vlog2.pop %v997
        %v1423 = vmul.f32 %v1422, 0.6931472
        %v1424 = vlog2.pop %v998
        %v1425 = vmul.f32 %v1424, 0.6931472
        %v1426 = vlog2.pop %v999
        %v1427 = vmul.f32 %v1426, 0.6931472
        %v1428 = vlog2.pop %v1000
        %v1429 = vmul.f32 %v1428, 0.6931472
        %v1430 = vlog2.pop %v1001
        %v1431 = vmul.f32 %v1430, 0.6931472
        %v1432 = vsub.f32 0.0, %v1401
        %v1433 = vsub.f32 0.0, %v1403
        %v1434 = vsub.f32 0.0, %v1405
        %v1435 = vsub.f32 0.0, %v1407
        %v1436 = vsub.f32 0.0, %v1409
        %v1437 = vsub.f32 0.0, %v1411
        %v1438 = vsub.f32 0.0, %v1413
        %v1439 = vsub.f32 0.0, %v1415
        %v1440 = vsub.f32 0.0, %v1417
        %v1441 = vsub.f32 0.0, %v1419
        %v1442 = vsub.f32 0.0, %v1421
        %v1443 = vsub.f32 0.0, %v1423
        %v1444 = vsub.f32 0.0, %v1425
        %v1445 = vsub.f32 0.0, %v1427
        %v1446 = vsub.f32 0.0, %v1429
        %v1447 = vsub.f32 0.0, %v1431
        %v1448 = vmul.f32 %v986, %v986
        %v1449 = vmul.f32 %v987, %v987
        %v1450 = vmul.f32 %v988, %v988
        %v1451 = vmul.f32 %v989, %v989
        %v1452 = vmul.f32 %v990, %v990
        %v1453 = vmul.f32 %v991, %v991
        %v1454 = vmul.f32 %v992, %v992
        %v1455 = vmul.f32 %v993, %v993
        %v1456 = vmul.f32 %v994, %v994
        %v1457 = vmul.f32 %v995, %v995
        %v1458 = vmul.f32 %v996, %v996
        %v1459 = vmul.f32 %v997, %v997
        %v1460 = vmul.f32 %v998, %v998
        %v1461 = vmul.f32 %v999, %v999
        %v1462 = vmul.f32 %v1000, %v1000
        %v1463 = vmul.f32 %v1001, %v1001
        %v1464 = vmul.f32 %v730, %v730
        %v1465 = vmul.f32 %v731, %v731
        %v1466 = vmul.f32 %v732, %v732
        %v1467 = vmul.f32 %v733, %v733
        %v1468 = vmul.f32 %v734, %v734
        %v1469 = vmul.f32 %v735, %v735
        %v1470 = vmul.f32 %v736, %v736
        %v1471 = vmul.f32 %v737, %v737
        %v1472 = vmul.f32 %v738, %v738
        %v1473 = vmul.f32 %v739, %v739
        %v1474 = vmul.f32 %v740, %v740
        %v1475 = vmul.f32 %v741, %v741
        %v1476 = vmul.f32 %v742, %v742
        %v1477 = vmul.f32 %v743, %v743
        %v1478 = vmul.f32 %v744, %v744
        %v1479 = vmul.f32 %v745, %v745
        %v1480 = vadd.f32 %v1448, %v1464
        %v1481 = vadd.f32 %v1449, %v1465
        %v1482 = vadd.f32 %v1450, %v1466
        %v1483 = vadd.f32 %v1451, %v1467
        %v1484 = vadd.f32 %v1452, %v1468
        %v1485 = vadd.f32 %v1453, %v1469
        %v1486 = vadd.f32 %v1454, %v1470
        %v1487 = vadd.f32 %v1455, %v1471
        %v1488 = vadd.f32 %v1456, %v1472
        %v1489 = vadd.f32 %v1457, %v1473
        %v1490 = vadd.f32 %v1458, %v1474
        %v1491 = vadd.f32 %v1459, %v1475
        %v1492 = vadd.f32 %v1460, %v1476
        %v1493 = vadd.f32 %v1461, %v1477
        %v1494 = vadd.f32 %v1462, %v1478
        %v1495 = vadd.f32 %v1463, %v1479
        %v1496 = vmul.f32 %v1480, 0.5
        %v1497 = vmul.f32 %v1481, 0.5
        %v1498 = vmul.f32 %v1482, 0.5
        %v1499 = vmul.f32 %v1483, 0.5
        %v1500 = vmul.f32 %v1484, 0.5
        %v1501 = vmul.f32 %v1485, 0.5
        %v1502 = vmul.f32 %v1486, 0.5
        %v1503 = vmul.f32 %v1487, 0.5
        %v1504 = vmul.f32 %v1488, 0.5
        %v1505 = vmul.f32 %v1489, 0.5
        %v1506 = vmul.f32 %v1490, 0.5
        %v1507 = vmul.f32 %v1491, 0.5
        %v1508 = vmul.f32 %v1492, 0.5
        %v1509 = vmul.f32 %v1493, 0.5
        %v1510 = vmul.f32 %v1494, 0.5
        %v1511 = vmul.f32 %v1495, 0.5
        %v1512 = vadd.f32 %v1432, %v1496
        %v1513 = vadd.f32 %v1433, %v1497
        %v1514 = vadd.f32 %v1434, %v1498
        %v1515 = vadd.f32 %v1435, %v1499
        %v1516 = vadd.f32 %v1436, %v1500
        %v1517 = vadd.f32 %v1437, %v1501
        %v1518 = vadd.f32 %v1438, %v1502
        %v1519 = vadd.f32 %v1439, %v1503
        %v1520 = vadd.f32 %v1440, %v1504
        %v1521 = vadd.f32 %v1441, %v1505
        %v1522 = vadd.f32 %v1442, %v1506
        %v1523 = vadd.f32 %v1443, %v1507
        %v1524 = vadd.f32 %v1444, %v1508
        %v1525 = vadd.f32 %v1445, %v1509
        %v1526 = vadd.f32 %v1446, %v1510
        %v1527 = vadd.f32 %v1447, %v1511
        %v1528 = vsub.f32 %v1512, 0.5
        %v1529 = vsub.f32 %v1513, 0.5
        %v1530 = vsub.f32 %v1514, 0.5
        %v1531 = vsub.f32 %v1515, 0.5
        %v1532 = vsub.f32 %v1516, 0.5
        %v1533 = vsub.f32 %v1517, 0.5
        %v1534 = vsub.f32 %v1518, 0.5
        %v1535 = vsub.f32 %v1519, 0.5
        %v1536 = vsub.f32 %v1520, 0.5
        %v1537 = vsub.f32 %v1521, 0.5
        %v1538 = vsub.f32 %v1522, 0.5
        %v1539 = vsub.f32 %v1523, 0.5
        %v1540 = vsub.f32 %v1524, 0.5
        %v1541 = vsub.f32 %v1525, 0.5
        %v1542 = vsub.f32 %v1526, 0.5
        %v1543 = vsub.f32 %v1527, 0.5
        %v1544 = vsel %vm1384, %v1528, 0.0
        %v1545 = vsel %vm1385, %v1529, 0.0
        %v1546 = vsel %vm1386, %v1530, 0.0
        %v1547 = vsel %vm1387, %v1531, 0.0
        %v1548 = vsel %vm1388, %v1532, 0.0
        %v1549 = vsel %vm1389, %v1533, 0.0
        %v1550 = vsel %vm1390, %v1534, 0.0
        %v1551 = vsel %vm1391, %v1535, 0.0
        %v1552 = vsel %vm1392, %v1536, 0.0
        %v1553 = vsel %vm1393, %v1537, 0.0
        %v1554 = vsel %vm1394, %v1538, 0.0
        %v1555 = vsel %vm1395, %v1539, 0.0
        %v1556 = vsel %vm1396, %v1540, 0.0
        %v1557 = vsel %vm1397, %v1541, 0.0
        %v1558 = vsel %vm1398, %v1542, 0.0
        %v1559 = vsel %vm1399, %v1543, 0.0
        %v1560 = vld [vmem:[%s723] sm:$0x1]
        %v1561 = vadd.f32 %v1544, %v1545
        %v1562 = vadd.f32 %v1561, %v1546
        %v1563 = vadd.f32 %v1562, %v1547
        %v1564 = vadd.f32 %v1563, %v1548
        %v1565 = vadd.f32 %v1564, %v1549
        %v1566 = vadd.f32 %v1565, %v1550
        %v1567 = vadd.f32 %v1566, %v1551
        %v1568 = vadd.f32 %v1567, %v1552
        %v1569 = vadd.f32 %v1568, %v1553
        %v1570 = vadd.f32 %v1569, %v1554
        %v1571 = vadd.f32 %v1570, %v1555
        %v1572 = vadd.f32 %v1571, %v1556
        %v1573 = vadd.f32 %v1572, %v1557
        %v1574 = vadd.f32 %v1573, %v1558
        %v1575 = vadd.f32 %v1574, %v1559
        %v1576 = vrot.slane %v1575, 4
        %v1577 = vadd.f32 %v1575, %v1576
        %v1578 = vrot.slane %v1577, 2
        %v1579 = vadd.f32 %v1577, %v1578
        %v1580 = vrot.slane %v1579, 1
        %v1581 = vadd.f32 %v1579, %v1580
        %v1582 = vadd.f32 %v1560, %v1581
        %1583 = vst [vmem:[%s723] sm:$0x1] %v1582
        %p1584 = scmp.eq.s32.totalorder %s28, 2
        // Predicated region
        $region167: #{bayesian_linear.1} parent=149 // pred_check
          %p1585 = pneg %p1584
        $region168: #{bayesian_linear.1} parent=149 // pred_check_branch
          %1587 = sbr.rel (%p1585) target = $region170
        $region169: #{bayesian_linear.1} parent=149 // pred_region
          %v1588 = vld [vmem:[%s713] sm:$0x1]
          %v1589 = vld [vmem:[%s716] sm:$0x1]
          %v1590 = vmax.f32 %v1589, 0.0
          %v1591 = vand.u32 2147483647, %v1589
          %v1592 = vsub.f32 0.0, %v1591
          %v1593 = vmul.f32 %v1592, 1.442695
          %v1594 = vpow.pop %v1593
          %v1595 = vadd.f32 %v1594, 1.0
          %v1596 = vlog2.pop %v1595
          %v1597 = vmul.f32 %v1596, 0.6931472
          %v1598 = vmul.f32 -0.5, %v1594
          %v1599 = vadd.f32 %v1598, 1.0
          %v1600 = vmul.f32 %v1599, %v1594
          %v1601 = vand.u32 2147483647, %v1594
          %vm1602 = vcmp.lt.f32.partialorder %v1601, 0.0004427343
          %v1603 = vsel %vm1602, %v1600, %v1597
          %v1604 = vadd.f32 %v1590, %v1603
          %v1605 = vmul.f32 %v1604, -10.0
          %v1606 = vmul.f32 %v1605, 1.442695
          %v1607 = vpow.pop %v1606
          %v1608 = vadd.f32 %v1607, 1.0
          %v1609 = vlog2.pop %v1608
          %v1610 = vmul.f32 %v1609, 0.6931472
          %v1611 = vmul.f32 -0.5, %v1607
          %v1612 = vadd.f32 %v1611, 1.0
          %v1613 = vmul.f32 %v1612, %v1607
          %v1614 = vand.u32 2147483647, %v1607
          %vm1615 = vcmp.lt.f32.partialorder %v1614, 0.0004427343
          %v1616 = vsel %vm1615, %v1613, %v1610
          %v1617 = vmul.f32 %v1616, %v1194
          %v1618 = vadd.f32 %v1604, %v1617
          %v1619 = vld [vmem:[%s720] sm:$0x1]
          %v1620 = vmul.f32 %v1618, %v1619
          %v1621 = vadd.f32 %v1588, %v1620
          %v1622 = vld [vmem:[#allocation2] sm:$0xff]
          %v1624 = vlaneseq
          %v1625 = vshrl.u32 %v1624, 7
          %v1626 = vsub.s32 0, %v1625
          %v1627 = vrot.slane %v1621, %v1626
          %v1629 = vadd.f32 %v1622, %v1627
          %1630 = vst [vmem:[%s699] sm:$0xff] %v1629
          %v1631 = vld [vmem:[%s723] sm:$0x1]
          %v1632 = vlog2.pop %v1604
          %v1633 = vmul.f32 %v1632, 0.6931472
          %v1634 = vsub.f32 0.0, %v1633
          %v1635 = vmul.f32 %v1604, %v1604
          %v1636 = vmul.f32 %v1588, %v1588
          %v1637 = vadd.f32 %v1635, %v1636
          %v1638 = vmul.f32 %v1637, 0.5
          %v1639 = vadd.f32 %v1634, %v1638
          %v1640 = vsub.f32 %v1639, 0.5
          %v1641 = vadd.f32 %v1631, %v1640
          %1642 = vst [vmem:[%s723] sm:$0x1] %v1641
        $region170: #{bayesian_linear.1} parent=149 // pred_fallthru
          _
        %s1643 = sand.u32 %s231, 1
        %s1644 = scalar_lea.sflag [#allocation7], %s1643
        %s1645 = sand.u32 %s231, 1
        %s1646 = smul.addr %s1645, 8
        %s1647 = scalar_lea.vmem [#allocation6], %s1646
        %p1648 = scmp.lt.s32.totalorder %s27, 2
        %s1649 = scalar_select %p1648, %s27, 2
        %s1650 = scalar_lea.vmem %s8, %s1649
        // Predicated region
        $region171: #{bayesian_linear.1} parent=149 // pred_check
          %p1651 = pneg %p241
        $region172: #{bayesian_linear.1} parent=149 // pred_check_branch
          %1653 = sbr.rel (%p1651) target = $region174
        $region173: #{bayesian_linear.1} parent=149 // pred_region
          %s1655 = ssub.s32 128, 128
          %1656 = vsyncadd %s1644, %s1655
          %s1657 = smul.addr %s27, 128
          %s1658 = scalar_lea.hbm %s7, %s1657
          %s1660 = sshll.u32 %s1647, 4
          %s1661 = int_to_ptr.vmem [resolvable:$true] %s1660
          %1663 = dma.vmem_to_hbm [thread:$0]  %s1661, 128, %s1658, %s1644
        $region174: #{bayesian_linear.1} parent=149 // pred_fallthru
          _
        // Predicated region
        $region175: #{bayesian_linear.1} parent=149 // pred_check
          %p1664 = pneg %p267
        $region176: #{bayesian_linear.1} parent=149 // pred_check_branch
          %1666 = sbr.rel (%p1664) target = $region178
        $region177: #{bayesian_linear.1} parent=149 // pred_region
          _
        $region178: #{bayesian_linear.1} parent=149 // pred_fallthru
          _
      $region150: #{bayesian_linear.1} parent=5 // pred_fallthru
        _
      %p1667 = scmp.le.s32.totalorder 2, %s18
      // Predicated region
      $region179: #{bayesian_linear.1} parent=5 // pred_check
        %p1668 = pneg %p1667
      $region180: #{bayesian_linear.1} parent=5 // pred_check_branch
        %1670 = sbr.rel (%p1668) target = $region182
      $region181: #{bayesian_linear.1} parent=5 // pred_region
        %s1671 = ssub.s32 %s18, 2
        // Predicated region
        $region183: #{bayesian_linear.1} parent=181 // pred_check
          %p1672 = pneg %p247
        $region184: #{bayesian_linear.1} parent=181 // pred_check_branch
          %1674 = sbr.rel (%p1672) target = $region186
        $region185: #{bayesian_linear.1} parent=181 // pred_region
          %s1675 = sand.u32 %s232, 1
          %s1676 = scalar_lea.sflag [#allocation7], %s1675
          %s1677 = sand.u32 %s232, 1
          %s1678 = smul.addr %s1677, 8
          %s1679 = scalar_lea.vmem [#allocation6], %s1678
          %1680 = dma.done %s1676, 128
        $region186: #{bayesian_linear.1} parent=181 // pred_fallthru
          _
        // Predicated region
        $region187: #{bayesian_linear.1} parent=181 // pred_check
          %p1681 = pneg %p273
        $region188: #{bayesian_linear.1} parent=181 // pred_check_branch
          %1683 = sbr.rel (%p1681) target = $region190
        $region189: #{bayesian_linear.1} parent=181 // pred_region
          %p1684 = scmp.lt.s32.totalorder %s29, 2
          %s1685 = scalar_select %p1684, %s29, 2
          %s1686 = scalar_lea.vmem %s8, %s1685
        $region190: #{bayesian_linear.1} parent=181 // pred_fallthru
          _
      $region182: #{bayesian_linear.1} parent=5 // pred_fallthru
        _
    $region6: #{bayesian_linear.1} parent=1 // loop_footer
      %s22 = sadd.s32 1, %s18
    $region7: #{bayesian_linear.1} parent=1 // loop_footer_branch
      %17 = sbr.rel target = $region3
    $region8: #{bayesian_linear.1} parent=1 // loop_exit
      _
    %1687 = vsyncpa [#allocation7], 1
    %s1688 = scalar_lea.sflag [#allocation7], 1
    %1689 = vsyncpa %s1688, 1

</llo_original>
